<compile_context>
chip_gen: v7x
topology: tpu7x:2x2x1
jax: 0.10.0
libtpu: 0.0.40
codegen_flags: <defaults>
</compile_context>

<pallas_src>
import jax
import jax.numpy as jnp
from jax import lax
from jax.experimental import pallas as pl
from jax.experimental.pallas import tpu as pltpu

# Problem sizes (small, consistent with the module).
B, C, N, H, A = 2, 32, 16, 8, 8
DH = C // H
SCALE = DH ** -0.5            # = 0.5 exactly (power of two -> exact when folded into weights)
LN_EPS = 1e-5
LOG_N = N.bit_length() - 1    # head id of stacked row r is r >> LOG_N
LOG_DH = DH.bit_length() - 1  # head id of channel c is c >> LOG_DH

DATA_ROWS = 2 * N + A         # 40: [node (N,C) | edge (N,N padded to C) | prior (A,C)]
PARAM_ROWS = C + H            # 40: [qkv_w|proj_w (C rows) | per-channel vectors + per-head scalars]
OUT_ROWS = 2 * N              # 32: [node (N,C) | edge (N,N padded to C)]


def _sum_heads(x3):
    """Sum an (H, N, X) value over its leading head axis (8 unrolled vreg adds)."""
    acc = x3[0]
    for h in range(1, H):
        acc = acc + x3[h]
    return acc


def _head_channel_mask():
    """(H*N, C) mask selecting, for stacked row r = h*N + n, the channels of head h.
    Recomputed at each use site (2 iotas + 1 compare, ~free on the VPU) so its
    16-vreg footprint does not stay live across the stacked matmuls / softmax."""
    rh = lax.broadcasted_iota(jnp.int32, (H * N, C), 0) >> LOG_N
    ch = lax.broadcasted_iota(jnp.int32, (H * N, C), 1) >> LOG_DH
    return rh == ch


def _gpa_kernel(data_ref, params_ref, out_ref):
    # ---- batch-invariant parameter views (static ref slices, loaded once) --------
    qkv_w = params_ref[0:C, 0:3 * C]              # (C, 3C), q columns pre-scaled by SCALE
    proj_w = params_ref[0:C, 3 * C:4 * C]         # (C, C)
    ln_g = params_ref[C + 0:C + 1, 0:C]           # (1, C)
    ln_b = params_ref[C + 1:C + 2, 0:C]
    proj_b = params_ref[C + 2:C + 3, 0:C]
    fc_w = params_ref[C + 3:C + 4, 0:C]
    fc_b = params_ref[C + 4:C + 5, 0:C]
    hp3 = params_ref[C:C + H, C:C + 4].reshape(H, 1, 4)   # per-head [exp_w, exp_b, red_w, red_b]
    exp_w3 = hp3[:, :, 0:1]                       # (H, 1, 1)  expand: Conv2d(1, H, 1x1)
    exp_b3 = hp3[:, :, 1:2]
    red_w3 = hp3[:, :, 2:3]                       #             reduce: Conv2d(H, 1, 1x1)
    red_b = params_ref[C:C + 1, C + 3:C + 4]      # (1, 1)

    rows_nn = lax.broadcasted_iota(jnp.int32, (N, N), 0)
    cols_nn = lax.broadcasted_iota(jnp.int32, (N, N), 1)

    # ---- fully unrolled batch loop (B = 2): one grid step, one DMA set -----------
    for b in range(B):
        x = data_ref[b, 0:N, :]                   # (N, C) node, already in (N, C) layout
        e = data_ref[b, N:2 * N, 0:N]             # (N, N) edge_embeds
        prior = data_ref[b, 2 * N:2 * N + A, :]   # (A, C) da_prior

        # graph propagation prologue:
        #   einsum('bnn,bnc->bnc', E, X) -> diag(E) * X ; einsum('bnc,bca->bnc') -> * prior.sum(a)
        diag = jnp.sum(jnp.where(rows_nn == cols_nn, e, 0.0), axis=-1, keepdims=True)  # (N, 1)
        prior_sum = jnp.sum(prior, axis=0, keepdims=True)                              # (1, C)
        node = diag * x * prior_sum + x

        # LayerNorm(C) (rsqrt on the EUP)
        mu = jnp.mean(node, axis=-1, keepdims=True)
        var = jnp.mean((node - mu) ** 2, axis=-1, keepdims=True)
        normed = (node - mu) * lax.rsqrt(var + LN_EPS) * ln_g + ln_b

        # qkv projection: one MXU matmul (attention scale pre-folded into q weights)
        qkv = jnp.dot(normed, qkv_w, preferred_element_type=jnp.float32)   # (N, 3C)
        q = qkv[:, :C]
        k = qkv[:, C:2 * C]
        v = qkv[:, 2 * C:]

        # head-stacked attention: all H heads in two sublane-dense MXU matmuls
        q_rep = jnp.where(_head_channel_mask(),
                          jnp.broadcast_to(q[None], (H, N, C)).reshape(H * N, C), 0.0)
        s = lax.dot_general(q_rep, k, (((1,), (1,)), ((), ())),
                            preferred_element_type=jnp.float32)            # (H*N, N)
        s3 = s.reshape(H, N, N) + exp_w3 * e[None, :, :] + exp_b3          # + attention bias

        m = jnp.max(s3, axis=-1, keepdims=True)
        p3 = jnp.exp(s3 - m)
        p3 = p3 * pl.reciprocal(jnp.sum(p3, axis=-1, keepdims=True), approx=False)

        # edge output: reduce over heads of (softmax + post-bias residual)
        edge_new = _sum_heads(red_w3 * (p3 + s3)) + red_b                  # (N, N)

        # PV for all heads at once, then pick each head's channel block back
        pv = jnp.dot(p3.reshape(H * N, N), v, preferred_element_type=jnp.float32)  # (H*N, C)
        node_attn = _sum_heads(jnp.where(_head_channel_mask(), pv, 0.0).reshape(H, N, C))

        # edge -> node feedback: w = sum(softmax(edge) * edge, -1); fc = Linear(1, C)
        mw = jnp.max(edge_new, axis=-1, keepdims=True)
        we = jnp.exp(edge_new - mw)
        wsm = we * pl.reciprocal(jnp.sum(we, axis=-1, keepdims=True), approx=False)
        w = jnp.sum(wsm * edge_new, axis=-1, keepdims=True)                # (N, 1)

        node2 = node_attn + (w * fc_w + fc_b)
        node3 = jnp.dot(node2, proj_w, preferred_element_type=jnp.float32) + proj_b

        # fused output slab: node rows 0:N (lane-dense, C=32), edge rows N:2N
        out_ref[b, 0:N, :] = node3
        out_ref[b, N:2 * N, 0:N] = edge_new
        out_ref[b, N:2 * N, N:C] = jnp.zeros((N, C - N), jnp.float32)


def pack_params(p):
    """One-time packing of all module parameters into ONE lane-dense (40, 128) slab."""
    slab = jnp.zeros((PARAM_ROWS, 4 * C), jnp.float32)
    qkv_w = p['qkv_w'].at[:, :C].multiply(SCALE)           # fold attention scale (exact: 0.5)
    slab = slab.at[0:C, 0:3 * C].set(qkv_w)
    slab = slab.at[0:C, 3 * C:4 * C].set(p['proj_w'])
    slab = slab.at[C + 0, 0:C].set(p['ln_g'][0])
    slab = slab.at[C + 1, 0:C].set(p['ln_b'][0])
    slab = slab.at[C + 2, 0:C].set(p['proj_b'][0])
    slab = slab.at[C + 3, 0:C].set(p['fc_w'][0])
    slab = slab.at[C + 4, 0:C].set(p['fc_b'][0])
    slab = slab.at[C:C + H, C + 0].set(p['exp_w'])
    slab = slab.at[C:C + H, C + 1].set(p['exp_b'])
    slab = slab.at[C:C + H, C + 2].set(p['red_w'])
    slab = slab.at[C, C + 3].set(p['red_b'][0])
    return slab


@jax.jit
def graph_propagation_attention(node_embeds, edge_embeds, da_prior, param_slab):
    """node_embeds: (B, C, N), edge_embeds: (B, N, N), da_prior: (B, A, C)."""
    # Pack the 3 batch-varying inputs into ONE lane-dense (B, 40, 32) slab.  This is
    # pure layout plumbing (~10 KB) fused by XLA; it cuts 3 input DMAs to 1 and
    # deletes the in-kernel eye_n transpose matmul.
    x_nc = jnp.transpose(node_embeds, (0, 2, 1))                         # (B, N, C)
    e_pad = jnp.pad(edge_embeds, ((0, 0), (0, 0), (0, C - N)))           # (B, N, C)
    data = jnp.concatenate([x_nc, e_pad, da_prior], axis=1)              # (B, 40, C)

    out = pl.pallas_call(
        _gpa_kernel,
        out_shape=jax.ShapeDtypeStruct((B, OUT_ROWS, C), jnp.float32),
        grid_spec=pltpu.PrefetchScalarGridSpec(
            num_scalar_prefetch=0,
            grid=(1,),   # single step: batch B=2 handled by an unrolled loop in the kernel
            in_specs=[
                pl.BlockSpec((B, DATA_ROWS, C), lambda i: (0, 0, 0)),    # packed per-batch inputs
                pl.BlockSpec((PARAM_ROWS, 4 * C), lambda i: (0, 0)),     # packed parameters
            ],
            out_specs=pl.BlockSpec((B, OUT_ROWS, C), lambda i: (0, 0, 0)),  # fused outputs
        ),
        compiler_params=pltpu.CompilerParams(dimension_semantics=("arbitrary",)),
    )(data, param_slab)

    node_out = jnp.transpose(out[:, 0:N, :], (0, 2, 1))                  # (B, C, N)
    edge_out = out[:, N:2 * N, 0:N]                                      # (B, N, N)
    return node_out, edge_out


def reference(node_embeds, edge_embeds, da_prior, p):
    """Pure-JAX mirror of the PyTorch forward (literal translation)."""
    x = jnp.transpose(node_embeds, (0, 2, 1))                            # (B, N, C)
    attned = jnp.einsum('bnn,bnc->bnc', edge_embeds, x)
    prior = jnp.transpose(da_prior, (0, 2, 1))                           # (B, C, A)
    x = jnp.einsum('bnc,bca->bnc', attned, prior) + x

    mu = jnp.mean(x, -1, keepdims=True)
    var = jnp.mean((x - mu) ** 2, -1, keepdims=True)
    normed = (x - mu) / jnp.sqrt(var + LN_EPS) * p['ln_g'][0] + p['ln_b'][0]

    qkv = normed @ p['qkv_w']
    qkv = qkv.reshape(B, N, 3, H, DH).transpose(2, 0, 3, 1, 4)
    q, k, v = qkv[0], qkv[1], qkv[2]                                     # (B, H, N, DH)

    attn = jnp.einsum('bhnd,bhmd->bhnm', q, k) * SCALE
    bias = p['exp_w'][:, None, None] * edge_embeds[:, None] + p['exp_b'][:, None, None]
    attn = attn + bias
    residual = attn
    sm = jax.nn.softmax(attn, axis=-1)
    node = jnp.einsum('bhnm,bhmd->bhnd', sm, v).transpose(0, 2, 1, 3).reshape(B, N, C)

    edge_new = jnp.einsum('h,bhnm->bnm', p['red_w'], sm + residual) + p['red_b'][0]
    w = jax.nn.softmax(edge_new, -1)
    w = jnp.sum(w * edge_new, -1)[..., None]                             # (B, N, 1)
    node = node + (w * p['fc_w'][0] + p['fc_b'][0])
    node = node @ p['proj_w'] + p['proj_b'][0]
    return jnp.transpose(node, (0, 2, 1)), edge_new


if __name__ == "__main__":
    key = jax.random.PRNGKey(0)
    ks = jax.random.split(key, 16)

    # Deterministic synthetic parameters (PyTorch Linear weights stored transposed: (in, out)).
    params = {
        'ln_g':   1.0 + 0.1 * jax.random.normal(ks[0], (1, C), jnp.float32),
        'ln_b':   0.1 * jax.random.normal(ks[1], (1, C), jnp.float32),
        'qkv_w':  0.1 * jax.random.normal(ks[2], (C, 3 * C), jnp.float32),   # qkv_bias=False
        'proj_w': 0.1 * jax.random.normal(ks[3], (C, C), jnp.float32),
        'proj_b': 0.1 * jax.random.normal(ks[4], (1, C), jnp.float32),
        'fc_w':   0.1 * jax.random.normal(ks[5], (1, C), jnp.float32),       # Linear(1, C)
        'fc_b':   0.1 * jax.random.normal(ks[6], (1, C), jnp.float32),
        'exp_w':  0.1 * jax.random.normal(ks[7], (H,), jnp.float32),          # Conv2d(1, H, 1)
        'exp_b':  0.1 * jax.random.normal(ks[8], (H,), jnp.float32),
        'red_w':  0.1 * jax.random.normal(ks[9], (H,), jnp.float32),          # Conv2d(H, 1, 1)
        'red_b':  0.1 * jax.random.normal(ks[10], (1,), jnp.float32),
    }

    node_embeds = jax.random.normal(ks[11], (B, C, N), jnp.float32)
    edge_embeds = jax.random.normal(ks[12], (B, N, N), jnp.float32)
    da_prior = jax.random.normal(ks[13], (B, A, C), jnp.float32)

    param_slab = pack_params(params)   # done once, outside the hot path

    node_out, edge_out = graph_propagation_attention(node_embeds, edge_embeds, da_prior, param_slab)
    jax.block_until_ready((node_out, edge_out))

    ref_node, ref_edge = reference(node_embeds, edge_embeds, da_prior, params)
    assert node_out.shape == (B, C, N) and edge_out.shape == (B, N, N)
    assert jnp.allclose(node_out, ref_node, atol=1e-4, rtol=1e-4)
    assert jnp.allclose(edge_out, ref_edge, atol=1e-4, rtol=1e-4)
    print("KERNEL_OK")
</pallas_src>

<mosaic_0001>
module attributes {stable_mosaic.version = 11 : i64} {
  func.func @_gpa_kernel(%arg0: i32, %arg1: memref<2x40x32xf32, #tpu.memory_space<vmem>>, %arg2: memref<40x128xf32, #tpu.memory_space<vmem>>, %arg3: memref<2x32x32xf32, #tpu.memory_space<vmem>>) attributes {dimension_semantics = [#tpu.dimension_semantics<arbitrary>], iteration_bounds = array<i64: 1>, scalar_prefetch = 0 : i64, scratch_operands = 0 : i64, tpu.core_type = #tpu.core_type<tc>, window_params = [{pipeline_mode = #tpu.pipeline_mode<synchronous>, transform_indices = @transform_0, window_bounds = array<i64: 2, 40, 32>}, {pipeline_mode = #tpu.pipeline_mode<synchronous>, transform_indices = @transform_1, window_bounds = array<i64: 40, 128>}, {pipeline_mode = #tpu.pipeline_mode<synchronous>, transform_indices = @transform_2, window_bounds = array<i64: 2, 32, 32>}]} {
    %c0 = arith.constant 0 : index
    %c0_0 = arith.constant 0 : index
    %0 = vector.load %arg2[%c0, %c0_0] : memref<40x128xf32, #tpu.memory_space<vmem>>, vector<32x96xf32>
    %c0_1 = arith.constant 0 : index
    %c96 = arith.constant 96 : index
    %1 = vector.load %arg2[%c0_1, %c96] : memref<40x128xf32, #tpu.memory_space<vmem>>, vector<32x32xf32>
    %c32 = arith.constant 32 : index
    %c0_2 = arith.constant 0 : index
    %2 = vector.load %arg2[%c32, %c0_2] : memref<40x128xf32, #tpu.memory_space<vmem>>, vector<1x32xf32>
    %c33 = arith.constant 33 : index
    %c0_3 = arith.constant 0 : index
    %3 = vector.load %arg2[%c33, %c0_3] : memref<40x128xf32, #tpu.memory_space<vmem>>, vector<1x32xf32>
    %c34 = arith.constant 34 : index
    %c0_4 = arith.constant 0 : index
    %4 = vector.load %arg2[%c34, %c0_4] : memref<40x128xf32, #tpu.memory_space<vmem>>, vector<1x32xf32>
    %c35 = arith.constant 35 : index
    %c0_5 = arith.constant 0 : index
    %5 = vector.load %arg2[%c35, %c0_5] : memref<40x128xf32, #tpu.memory_space<vmem>>, vector<1x32xf32>
    %c36 = arith.constant 36 : index
    %c0_6 = arith.constant 0 : index
    %6 = vector.load %arg2[%c36, %c0_6] : memref<40x128xf32, #tpu.memory_space<vmem>>, vector<1x32xf32>
    %c32_7 = arith.constant 32 : index
    %c32_8 = arith.constant 32 : index
    %7 = vector.load %arg2[%c32_7, %c32_8] : memref<40x128xf32, #tpu.memory_space<vmem>>, vector<8x4xf32>
    %8 = vector.shape_cast %7 : vector<8x4xf32> to vector<8x1x4xf32>
    %9 = vector.extract_strided_slice %8 {offsets = [0, 0, 0], sizes = [8, 1, 1], strides = [1, 1, 1]} : vector<8x1x4xf32> to vector<8x1x1xf32>
    %10 = vector.extract_strided_slice %8 {offsets = [0, 0, 1], sizes = [8, 1, 1], strides = [1, 1, 1]} : vector<8x1x4xf32> to vector<8x1x1xf32>
    %11 = vector.extract_strided_slice %8 {offsets = [0, 0, 2], sizes = [8, 1, 1], strides = [1, 1, 1]} : vector<8x1x4xf32> to vector<8x1x1xf32>
    %c32_9 = arith.constant 32 : index
    %c35_10 = arith.constant 35 : index
    %12 = vector.load %arg2[%c32_9, %c35_10] : memref<40x128xf32, #tpu.memory_space<vmem>>, vector<1x1xf32>
    %13 = tpu.iota {dimensions = array<i32: 0>} : vector<16x16xi32>
    %14 = tpu.iota {dimensions = array<i32: 1>} : vector<16x16xi32>
    %c0_11 = arith.constant 0 : index
    %c0_12 = arith.constant 0 : index
    %c0_13 = arith.constant 0 : index
    %15 = vector.load %arg1[%c0_11, %c0_12, %c0_13] : memref<2x40x32xf32, #tpu.memory_space<vmem>>, vector<1x16x32xf32>
    %16 = vector.shape_cast %15 : vector<1x16x32xf32> to vector<16x32xf32>
    %c0_14 = arith.constant 0 : index
    %c16 = arith.constant 16 : index
    %c0_15 = arith.constant 0 : index
    %17 = vector.load %arg1[%c0_14, %c16, %c0_15] : memref<2x40x32xf32, #tpu.memory_space<vmem>>, vector<1x16x16xf32>
    %18 = vector.shape_cast %17 : vector<1x16x16xf32> to vector<16x16xf32>
    %c0_16 = arith.constant 0 : index
    %c32_17 = arith.constant 32 : index
    %c0_18 = arith.constant 0 : index
    %19 = vector.load %arg1[%c0_16, %c32_17, %c0_18] : memref<2x40x32xf32, #tpu.memory_space<vmem>>, vector<1x8x32xf32>
    %20 = vector.shape_cast %19 : vector<1x8x32xf32> to vector<8x32xf32>
    %21 = arith.cmpi eq, %13, %14 : vector<16x16xi32>
    %cst = arith.constant 0.000000e+00 : f32
    %22 = vector.broadcast %cst : f32 to vector<16x16xf32>
    %23 = arith.select %21, %18, %22 : vector<16x16xi1>, vector<16x16xf32>
    %cst_19 = arith.constant dense<0.000000e+00> : vector<16xf32>
    %24 = vector.multi_reduction <add>, %23, %cst_19 [1] : vector<16x16xf32> to vector<16xf32>
    %25 = vector.shape_cast %24 : vector<16xf32> to vector<16x1xf32>
    %cst_20 = arith.constant dense<0.000000e+00> : vector<32xf32>
    %26 = vector.multi_reduction <add>, %20, %cst_20 [0] : vector<8x32xf32> to vector<32xf32>
    %27 = vector.shape_cast %26 : vector<32xf32> to vector<1x32xf32>
    %28 = vector.broadcast %25 : vector<16x1xf32> to vector<16x32xf32>
    %29 = arith.mulf %28, %16 : vector<16x32xf32>
    %30 = vector.broadcast %27 : vector<1x32xf32> to vector<16x32xf32>
    %31 = arith.mulf %29, %30 : vector<16x32xf32>
    %32 = arith.addf %31, %16 : vector<16x32xf32>
    %cst_21 = arith.constant dense<0.000000e+00> : vector<16xf32>
    %33 = vector.multi_reduction <add>, %32, %cst_21 [1] : vector<16x32xf32> to vector<16xf32>
    %34 = vector.shape_cast %33 : vector<16xf32> to vector<16x1xf32>
    %cst_22 = arith.constant 3.200000e+01 : f32
    %35 = vector.broadcast %cst_22 : f32 to vector<16x1xf32>
    %36 = arith.divf %34, %35 : vector<16x1xf32>
    %37 = vector.broadcast %36 : vector<16x1xf32> to vector<16x32xf32>
    %38 = arith.subf %32, %37 : vector<16x32xf32>
    %39 = arith.mulf %38, %38 : vector<16x32xf32>
    %cst_23 = arith.constant dense<0.000000e+00> : vector<16xf32>
    %40 = vector.multi_reduction <add>, %39, %cst_23 [1] : vector<16x32xf32> to vector<16xf32>
    %41 = vector.shape_cast %40 : vector<16xf32> to vector<16x1xf32>
    %cst_24 = arith.constant 3.200000e+01 : f32
    %42 = vector.broadcast %cst_24 : f32 to vector<16x1xf32>
    %43 = arith.divf %41, %42 : vector<16x1xf32>
    %44 = vector.broadcast %36 : vector<16x1xf32> to vector<16x32xf32>
    %45 = arith.subf %32, %44 : vector<16x32xf32>
    %cst_25 = arith.constant 9.99999974E-6 : f32
    %46 = vector.broadcast %cst_25 : f32 to vector<16x1xf32>
    %47 = arith.addf %43, %46 : vector<16x1xf32>
    %48 = math.rsqrt %47 : vector<16x1xf32>
    %49 = vector.broadcast %48 : vector<16x1xf32> to vector<16x32xf32>
    %50 = arith.mulf %45, %49 : vector<16x32xf32>
    %51 = vector.broadcast %2 : vector<1x32xf32> to vector<16x32xf32>
    %52 = arith.mulf %50, %51 : vector<16x32xf32>
    %53 = vector.broadcast %3 : vector<1x32xf32> to vector<16x32xf32>
    %54 = arith.addf %52, %53 : vector<16x32xf32>
    %cst_26 = arith.constant dense<0.000000e+00> : vector<16x96xf32>
    %55 = tpu.matmul %54, %0, %cst_26 {dimension_numbers = #tpu.dot_dimension_numbers<[1], [0], [0], [1], [0, 0, 1, 1], [], []>} : vector<16x32xf32>, vector<32x96xf32>, vector<16x96xf32> -> vector<16x96xf32>
    %56 = vector.extract_strided_slice %55 {offsets = [0, 0], sizes = [16, 32], strides = [1, 1]} : vector<16x96xf32> to vector<16x32xf32>
    %57 = vector.extract_strided_slice %55 {offsets = [0, 32], sizes = [16, 32], strides = [1, 1]} : vector<16x96xf32> to vector<16x32xf32>
    %58 = vector.extract_strided_slice %55 {offsets = [0, 64], sizes = [16, 32], strides = [1, 1]} : vector<16x96xf32> to vector<16x32xf32>
    %59 = tpu.iota {dimensions = array<i32: 0>} : vector<128x32xi32>
    %c4_i32 = arith.constant 4 : i32
    %60 = vector.broadcast %c4_i32 : i32 to vector<128x32xi32>
    %61 = arith.shrsi %59, %60 : vector<128x32xi32>
    %62 = tpu.iota {dimensions = array<i32: 1>} : vector<128x32xi32>
    %c2_i32 = arith.constant 2 : i32
    %63 = vector.broadcast %c2_i32 : i32 to vector<128x32xi32>
    %64 = arith.shrsi %62, %63 : vector<128x32xi32>
    %65 = arith.cmpi eq, %61, %64 : vector<128x32xi32>
    %66 = vector.shape_cast %56 : vector<16x32xf32> to vector<1x16x32xf32>
    %67 = vector.shape_cast %66 : vector<1x16x32xf32> to vector<1x16x32xf32>
    %68 = vector.broadcast %67 : vector<1x16x32xf32> to vector<8x16x32xf32>
    %69 = vector.shape_cast %68 : vector<8x16x32xf32> to vector<128x32xf32>
    %cst_27 = arith.constant 0.000000e+00 : f32
    %70 = vector.broadcast %cst_27 : f32 to vector<128x32xf32>
    %71 = arith.select %65, %69, %70 : vector<128x32xi1>, vector<128x32xf32>
    %cst_28 = arith.constant dense<0.000000e+00> : vector<128x16xf32>
    %72 = tpu.matmul %71, %57, %cst_28 {dimension_numbers = #tpu.dot_dimension_numbers<[1], [1], [0], [0], [0, 0, 1, 0], [], []>} : vector<128x32xf32>, vector<16x32xf32>, vector<128x16xf32> -> vector<128x16xf32>
    %73 = vector.shape_cast %72 : vector<128x16xf32> to vector<8x16x16xf32>
    %74 = vector.shape_cast %18 : vector<16x16xf32> to vector<1x16x16xf32>
    %75 = vector.broadcast %9 : vector<8x1x1xf32> to vector<8x16x16xf32>
    %76 = vector.broadcast %74 : vector<1x16x16xf32> to vector<8x16x16xf32>
    %77 = arith.mulf %75, %76 : vector<8x16x16xf32>
    %78 = arith.addf %73, %77 : vector<8x16x16xf32>
    %79 = vector.broadcast %10 : vector<8x1x1xf32> to vector<8x16x16xf32>
    %80 = arith.addf %78, %79 : vector<8x16x16xf32>
    %cst_29 = arith.constant dense<0xFF800000> : vector<8x16xf32>
    %81 = vector.multi_reduction <maximumf>, %80, %cst_29 [2] : vector<8x16x16xf32> to vector<8x16xf32>
    %82 = vector.shape_cast %81 : vector<8x16xf32> to vector<8x16x1xf32>
    %83 = vector.broadcast %82 : vector<8x16x1xf32> to vector<8x16x16xf32>
    %84 = arith.subf %80, %83 : vector<8x16x16xf32>
    %85 = math.exp %84 : vector<8x16x16xf32>
    %cst_30 = arith.constant dense<0.000000e+00> : vector<8x16xf32>
    %86 = vector.multi_reduction <add>, %85, %cst_30 [2] : vector<8x16x16xf32> to vector<8x16xf32>
    %87 = vector.shape_cast %86 : vector<8x16xf32> to vector<8x16x1xf32>
    %88 = tpu.reciprocal %87 : vector<8x16x1xf32> -> vector<8x16x1xf32>
    %89 = vector.broadcast %88 : vector<8x16x1xf32> to vector<8x16x16xf32>
    %90 = arith.mulf %85, %89 : vector<8x16x16xf32>
    %91 = arith.addf %90, %80 : vector<8x16x16xf32>
    %92 = vector.broadcast %11 : vector<8x1x1xf32> to vector<8x16x16xf32>
    %93 = arith.mulf %92, %91 : vector<8x16x16xf32>
    %94 = vector.extract_strided_slice %93 {offsets = [0, 0, 0], sizes = [1, 16, 16], strides = [1, 1, 1]} : vector<8x16x16xf32> to vector<1x16x16xf32>
    %95 = vector.shape_cast %94 : vector<1x16x16xf32> to vector<16x16xf32>
    %96 = vector.extract_strided_slice %93 {offsets = [1, 0, 0], sizes = [1, 16, 16], strides = [1, 1, 1]} : vector<8x16x16xf32> to vector<1x16x16xf32>
    %97 = vector.shape_cast %96 : vector<1x16x16xf32> to vector<16x16xf32>
    %98 = arith.addf %95, %97 : vector<16x16xf32>
    %99 = vector.extract_strided_slice %93 {offsets = [2, 0, 0], sizes = [1, 16, 16], strides = [1, 1, 1]} : vector<8x16x16xf32> to vector<1x16x16xf32>
    %100 = vector.shape_cast %99 : vector<1x16x16xf32> to vector<16x16xf32>
    %101 = arith.addf %98, %100 : vector<16x16xf32>
    %102 = vector.extract_strided_slice %93 {offsets = [3, 0, 0], sizes = [1, 16, 16], strides = [1, 1, 1]} : vector<8x16x16xf32> to vector<1x16x16xf32>
    %103 = vector.shape_cast %102 : vector<1x16x16xf32> to vector<16x16xf32>
    %104 = arith.addf %101, %103 : vector<16x16xf32>
    %105 = vector.extract_strided_slice %93 {offsets = [4, 0, 0], sizes = [1, 16, 16], strides = [1, 1, 1]} : vector<8x16x16xf32> to vector<1x16x16xf32>
    %106 = vector.shape_cast %105 : vector<1x16x16xf32> to vector<16x16xf32>
    %107 = arith.addf %104, %106 : vector<16x16xf32>
    %108 = vector.extract_strided_slice %93 {offsets = [5, 0, 0], sizes = [1, 16, 16], strides = [1, 1, 1]} : vector<8x16x16xf32> to vector<1x16x16xf32>
    %109 = vector.shape_cast %108 : vector<1x16x16xf32> to vector<16x16xf32>
    %110 = arith.addf %107, %109 : vector<16x16xf32>
    %111 = vector.extract_strided_slice %93 {offsets = [6, 0, 0], sizes = [1, 16, 16], strides = [1, 1, 1]} : vector<8x16x16xf32> to vector<1x16x16xf32>
    %112 = vector.shape_cast %111 : vector<1x16x16xf32> to vector<16x16xf32>
    %113 = arith.addf %110, %112 : vector<16x16xf32>
    %114 = vector.extract_strided_slice %93 {offsets = [7, 0, 0], sizes = [1, 16, 16], strides = [1, 1, 1]} : vector<8x16x16xf32> to vector<1x16x16xf32>
    %115 = vector.shape_cast %114 : vector<1x16x16xf32> to vector<16x16xf32>
    %116 = arith.addf %113, %115 : vector<16x16xf32>
    %117 = vector.broadcast %12 : vector<1x1xf32> to vector<16x16xf32>
    %118 = arith.addf %116, %117 : vector<16x16xf32>
    %119 = vector.shape_cast %90 : vector<8x16x16xf32> to vector<128x16xf32>
    %cst_31 = arith.constant dense<0.000000e+00> : vector<128x32xf32>
    %120 = tpu.matmul %119, %58, %cst_31 {dimension_numbers = #tpu.dot_dimension_numbers<[1], [0], [0], [1], [0, 0, 1, 1], [], []>} : vector<128x16xf32>, vector<16x32xf32>, vector<128x32xf32> -> vector<128x32xf32>
    %121 = tpu.iota {dimensions = array<i32: 0>} : vector<128x32xi32>
    %c4_i32_32 = arith.constant 4 : i32
    %122 = vector.broadcast %c4_i32_32 : i32 to vector<128x32xi32>
    %123 = arith.shrsi %121, %122 : vector<128x32xi32>
    %124 = tpu.iota {dimensions = array<i32: 1>} : vector<128x32xi32>
    %c2_i32_33 = arith.constant 2 : i32
    %125 = vector.broadcast %c2_i32_33 : i32 to vector<128x32xi32>
    %126 = arith.shrsi %124, %125 : vector<128x32xi32>
    %127 = arith.cmpi eq, %123, %126 : vector<128x32xi32>
    %cst_34 = arith.constant 0.000000e+00 : f32
    %128 = vector.broadcast %cst_34 : f32 to vector<128x32xf32>
    %129 = arith.select %127, %120, %128 : vector<128x32xi1>, vector<128x32xf32>
    %130 = vector.shape_cast %129 : vector<128x32xf32> to vector<8x16x32xf32>
    %131 = vector.extract_strided_slice %130 {offsets = [0, 0, 0], sizes = [1, 16, 32], strides = [1, 1, 1]} : vector<8x16x32xf32> to vector<1x16x32xf32>
    %132 = vector.shape_cast %131 : vector<1x16x32xf32> to vector<16x32xf32>
    %133 = vector.extract_strided_slice %130 {offsets = [1, 0, 0], sizes = [1, 16, 32], strides = [1, 1, 1]} : vector<8x16x32xf32> to vector<1x16x32xf32>
    %134 = vector.shape_cast %133 : vector<1x16x32xf32> to vector<16x32xf32>
    %135 = arith.addf %132, %134 : vector<16x32xf32>
    %136 = vector.extract_strided_slice %130 {offsets = [2, 0, 0], sizes = [1, 16, 32], strides = [1, 1, 1]} : vector<8x16x32xf32> to vector<1x16x32xf32>
    %137 = vector.shape_cast %136 : vector<1x16x32xf32> to vector<16x32xf32>
    %138 = arith.addf %135, %137 : vector<16x32xf32>
    %139 = vector.extract_strided_slice %130 {offsets = [3, 0, 0], sizes = [1, 16, 32], strides = [1, 1, 1]} : vector<8x16x32xf32> to vector<1x16x32xf32>
    %140 = vector.shape_cast %139 : vector<1x16x32xf32> to vector<16x32xf32>
    %141 = arith.addf %138, %140 : vector<16x32xf32>
    %142 = vector.extract_strided_slice %130 {offsets = [4, 0, 0], sizes = [1, 16, 32], strides = [1, 1, 1]} : vector<8x16x32xf32> to vector<1x16x32xf32>
    %143 = vector.shape_cast %142 : vector<1x16x32xf32> to vector<16x32xf32>
    %144 = arith.addf %141, %143 : vector<16x32xf32>
    %145 = vector.extract_strided_slice %130 {offsets = [5, 0, 0], sizes = [1, 16, 32], strides = [1, 1, 1]} : vector<8x16x32xf32> to vector<1x16x32xf32>
    %146 = vector.shape_cast %145 : vector<1x16x32xf32> to vector<16x32xf32>
    %147 = arith.addf %144, %146 : vector<16x32xf32>
    %148 = vector.extract_strided_slice %130 {offsets = [6, 0, 0], sizes = [1, 16, 32], strides = [1, 1, 1]} : vector<8x16x32xf32> to vector<1x16x32xf32>
    %149 = vector.shape_cast %148 : vector<1x16x32xf32> to vector<16x32xf32>
    %150 = arith.addf %147, %149 : vector<16x32xf32>
    %151 = vector.extract_strided_slice %130 {offsets = [7, 0, 0], sizes = [1, 16, 32], strides = [1, 1, 1]} : vector<8x16x32xf32> to vector<1x16x32xf32>
    %152 = vector.shape_cast %151 : vector<1x16x32xf32> to vector<16x32xf32>
    %153 = arith.addf %150, %152 : vector<16x32xf32>
    %cst_35 = arith.constant dense<0xFF800000> : vector<16xf32>
    %154 = vector.multi_reduction <maximumf>, %118, %cst_35 [1] : vector<16x16xf32> to vector<16xf32>
    %155 = vector.shape_cast %154 : vector<16xf32> to vector<16x1xf32>
    %156 = vector.broadcast %155 : vector<16x1xf32> to vector<16x16xf32>
    %157 = arith.subf %118, %156 : vector<16x16xf32>
    %158 = math.exp %157 : vector<16x16xf32>
    %cst_36 = arith.constant dense<0.000000e+00> : vector<16xf32>
    %159 = vector.multi_reduction <add>, %158, %cst_36 [1] : vector<16x16xf32> to vector<16xf32>
    %160 = vector.shape_cast %159 : vector<16xf32> to vector<16x1xf32>
    %161 = tpu.reciprocal %160 : vector<16x1xf32> -> vector<16x1xf32>
    %162 = vector.broadcast %161 : vector<16x1xf32> to vector<16x16xf32>
    %163 = arith.mulf %158, %162 : vector<16x16xf32>
    %164 = arith.mulf %163, %118 : vector<16x16xf32>
    %cst_37 = arith.constant dense<0.000000e+00> : vector<16xf32>
    %165 = vector.multi_reduction <add>, %164, %cst_37 [1] : vector<16x16xf32> to vector<16xf32>
    %166 = vector.shape_cast %165 : vector<16xf32> to vector<16x1xf32>
    %167 = vector.broadcast %166 : vector<16x1xf32> to vector<16x32xf32>
    %168 = vector.broadcast %5 : vector<1x32xf32> to vector<16x32xf32>
    %169 = arith.mulf %167, %168 : vector<16x32xf32>
    %170 = vector.broadcast %6 : vector<1x32xf32> to vector<16x32xf32>
    %171 = arith.addf %169, %170 : vector<16x32xf32>
    %172 = arith.addf %153, %171 : vector<16x32xf32>
    %cst_38 = arith.constant dense<0.000000e+00> : vector<16x32xf32>
    %173 = tpu.matmul %172, %1, %cst_38 {dimension_numbers = #tpu.dot_dimension_numbers<[1], [0], [0], [1], [0, 0, 1, 1], [], []>} : vector<16x32xf32>, vector<32x32xf32>, vector<16x32xf32> -> vector<16x32xf32>
    %174 = vector.broadcast %4 : vector<1x32xf32> to vector<16x32xf32>
    %175 = arith.addf %173, %174 : vector<16x32xf32>
    %c0_39 = arith.constant 0 : index
    %c0_40 = arith.constant 0 : index
    %c0_41 = arith.constant 0 : index
    %176 = vector.load %arg3[%c0_39, %c0_40, %c0_41] : memref<2x32x32xf32, #tpu.memory_space<vmem>>, vector<1x16x32xf32>
    %177 = vector.shape_cast %176 : vector<1x16x32xf32> to vector<16x32xf32>
    %178 = vector.shape_cast %175 : vector<16x32xf32> to vector<1x16x32xf32>
    tpu.vector_store %arg3[%c0_39, %c0_40, %c0_41], %178 {strides = array<i32>} : memref<2x32x32xf32, #tpu.memory_space<vmem>>, vector<1x16x32xf32>,
    %c0_42 = arith.constant 0 : index
    %c16_43 = arith.constant 16 : index
    %c0_44 = arith.constant 0 : index
    %179 = vector.load %arg3[%c0_42, %c16_43, %c0_44] : memref<2x32x32xf32, #tpu.memory_space<vmem>>, vector<1x16x16xf32>
    %180 = vector.shape_cast %179 : vector<1x16x16xf32> to vector<16x16xf32>
    %181 = vector.shape_cast %118 : vector<16x16xf32> to vector<1x16x16xf32>
    tpu.vector_store %arg3[%c0_42, %c16_43, %c0_44], %181 {strides = array<i32>} : memref<2x32x32xf32, #tpu.memory_space<vmem>>, vector<1x16x16xf32>,
    %cst_45 = arith.constant 0.000000e+00 : f32
    %182 = vector.broadcast %cst_45 : f32 to vector<16x16xf32>
    %c0_46 = arith.constant 0 : index
    %c16_47 = arith.constant 16 : index
    %c16_48 = arith.constant 16 : index
    %183 = vector.load %arg3[%c0_46, %c16_47, %c16_48] : memref<2x32x32xf32, #tpu.memory_space<vmem>>, vector<1x16x16xf32>
    %184 = vector.shape_cast %183 : vector<1x16x16xf32> to vector<16x16xf32>
    %185 = vector.shape_cast %182 : vector<16x16xf32> to vector<1x16x16xf32>
    tpu.vector_store %arg3[%c0_46, %c16_47, %c16_48], %185 {strides = array<i32>} : memref<2x32x32xf32, #tpu.memory_space<vmem>>, vector<1x16x16xf32>,
    %c1 = arith.constant 1 : index
    %c0_49 = arith.constant 0 : index
    %c0_50 = arith.constant 0 : index
    %186 = vector.load %arg1[%c1, %c0_49, %c0_50] : memref<2x40x32xf32, #tpu.memory_space<vmem>>, vector<1x16x32xf32>
    %187 = vector.shape_cast %186 : vector<1x16x32xf32> to vector<16x32xf32>
    %c1_51 = arith.constant 1 : index
    %c16_52 = arith.constant 16 : index
    %c0_53 = arith.constant 0 : index
    %188 = vector.load %arg1[%c1_51, %c16_52, %c0_53] : memref<2x40x32xf32, #tpu.memory_space<vmem>>, vector<1x16x16xf32>
    %189 = vector.shape_cast %188 : vector<1x16x16xf32> to vector<16x16xf32>
    %c1_54 = arith.constant 1 : index
    %c32_55 = arith.constant 32 : index
    %c0_56 = arith.constant 0 : index
    %190 = vector.load %arg1[%c1_54, %c32_55, %c0_56] : memref<2x40x32xf32, #tpu.memory_space<vmem>>, vector<1x8x32xf32>
    %191 = vector.shape_cast %190 : vector<1x8x32xf32> to vector<8x32xf32>
    %192 = arith.cmpi eq, %13, %14 : vector<16x16xi32>
    %cst_57 = arith.constant 0.000000e+00 : f32
    %193 = vector.broadcast %cst_57 : f32 to vector<16x16xf32>
    %194 = arith.select %192, %189, %193 : vector<16x16xi1>, vector<16x16xf32>
    %cst_58 = arith.constant dense<0.000000e+00> : vector<16xf32>
    %195 = vector.multi_reduction <add>, %194, %cst_58 [1] : vector<16x16xf32> to vector<16xf32>
    %196 = vector.shape_cast %195 : vector<16xf32> to vector<16x1xf32>
    %cst_59 = arith.constant dense<0.000000e+00> : vector<32xf32>
    %197 = vector.multi_reduction <add>, %191, %cst_59 [0] : vector<8x32xf32> to vector<32xf32>
    %198 = vector.shape_cast %197 : vector<32xf32> to vector<1x32xf32>
    %199 = vector.broadcast %196 : vector<16x1xf32> to vector<16x32xf32>
    %200 = arith.mulf %199, %187 : vector<16x32xf32>
    %201 = vector.broadcast %198 : vector<1x32xf32> to vector<16x32xf32>
    %202 = arith.mulf %200, %201 : vector<16x32xf32>
    %203 = arith.addf %202, %187 : vector<16x32xf32>
    %cst_60 = arith.constant dense<0.000000e+00> : vector<16xf32>
    %204 = vector.multi_reduction <add>, %203, %cst_60 [1] : vector<16x32xf32> to vector<16xf32>
    %205 = vector.shape_cast %204 : vector<16xf32> to vector<16x1xf32>
    %cst_61 = arith.constant 3.200000e+01 : f32
    %206 = vector.broadcast %cst_61 : f32 to vector<16x1xf32>
    %207 = arith.divf %205, %206 : vector<16x1xf32>
    %208 = vector.broadcast %207 : vector<16x1xf32> to vector<16x32xf32>
    %209 = arith.subf %203, %208 : vector<16x32xf32>
    %210 = arith.mulf %209, %209 : vector<16x32xf32>
    %cst_62 = arith.constant dense<0.000000e+00> : vector<16xf32>
    %211 = vector.multi_reduction <add>, %210, %cst_62 [1] : vector<16x32xf32> to vector<16xf32>
    %212 = vector.shape_cast %211 : vector<16xf32> to vector<16x1xf32>
    %cst_63 = arith.constant 3.200000e+01 : f32
    %213 = vector.broadcast %cst_63 : f32 to vector<16x1xf32>
    %214 = arith.divf %212, %213 : vector<16x1xf32>
    %215 = vector.broadcast %207 : vector<16x1xf32> to vector<16x32xf32>
    %216 = arith.subf %203, %215 : vector<16x32xf32>
    %cst_64 = arith.constant 9.99999974E-6 : f32
    %217 = vector.broadcast %cst_64 : f32 to vector<16x1xf32>
    %218 = arith.addf %214, %217 : vector<16x1xf32>
    %219 = math.rsqrt %218 : vector<16x1xf32>
    %220 = vector.broadcast %219 : vector<16x1xf32> to vector<16x32xf32>
    %221 = arith.mulf %216, %220 : vector<16x32xf32>
    %222 = vector.broadcast %2 : vector<1x32xf32> to vector<16x32xf32>
    %223 = arith.mulf %221, %222 : vector<16x32xf32>
    %224 = vector.broadcast %3 : vector<1x32xf32> to vector<16x32xf32>
    %225 = arith.addf %223, %224 : vector<16x32xf32>
    %cst_65 = arith.constant dense<0.000000e+00> : vector<16x96xf32>
    %226 = tpu.matmul %225, %0, %cst_65 {dimension_numbers = #tpu.dot_dimension_numbers<[1], [0], [0], [1], [0, 0, 1, 1], [], []>} : vector<16x32xf32>, vector<32x96xf32>, vector<16x96xf32> -> vector<16x96xf32>
    %227 = vector.extract_strided_slice %226 {offsets = [0, 0], sizes = [16, 32], strides = [1, 1]} : vector<16x96xf32> to vector<16x32xf32>
    %228 = vector.extract_strided_slice %226 {offsets = [0, 32], sizes = [16, 32], strides = [1, 1]} : vector<16x96xf32> to vector<16x32xf32>
    %229 = vector.extract_strided_slice %226 {offsets = [0, 64], sizes = [16, 32], strides = [1, 1]} : vector<16x96xf32> to vector<16x32xf32>
    %230 = tpu.iota {dimensions = array<i32: 0>} : vector<128x32xi32>
    %c4_i32_66 = arith.constant 4 : i32
    %231 = vector.broadcast %c4_i32_66 : i32 to vector<128x32xi32>
    %232 = arith.shrsi %230, %231 : vector<128x32xi32>
    %233 = tpu.iota {dimensions = array<i32: 1>} : vector<128x32xi32>
    %c2_i32_67 = arith.constant 2 : i32
    %234 = vector.broadcast %c2_i32_67 : i32 to vector<128x32xi32>
    %235 = arith.shrsi %233, %234 : vector<128x32xi32>
    %236 = arith.cmpi eq, %232, %235 : vector<128x32xi32>
    %237 = vector.shape_cast %227 : vector<16x32xf32> to vector<1x16x32xf32>
    %238 = vector.shape_cast %237 : vector<1x16x32xf32> to vector<1x16x32xf32>
    %239 = vector.broadcast %238 : vector<1x16x32xf32> to vector<8x16x32xf32>
    %240 = vector.shape_cast %239 : vector<8x16x32xf32> to vector<128x32xf32>
    %cst_68 = arith.constant 0.000000e+00 : f32
    %241 = vector.broadcast %cst_68 : f32 to vector<128x32xf32>
    %242 = arith.select %236, %240, %241 : vector<128x32xi1>, vector<128x32xf32>
    %cst_69 = arith.constant dense<0.000000e+00> : vector<128x16xf32>
    %243 = tpu.matmul %242, %228, %cst_69 {dimension_numbers = #tpu.dot_dimension_numbers<[1], [1], [0], [0], [0, 0, 1, 0], [], []>} : vector<128x32xf32>, vector<16x32xf32>, vector<128x16xf32> -> vector<128x16xf32>
    %244 = vector.shape_cast %243 : vector<128x16xf32> to vector<8x16x16xf32>
    %245 = vector.shape_cast %189 : vector<16x16xf32> to vector<1x16x16xf32>
    %246 = vector.broadcast %9 : vector<8x1x1xf32> to vector<8x16x16xf32>
    %247 = vector.broadcast %245 : vector<1x16x16xf32> to vector<8x16x16xf32>
    %248 = arith.mulf %246, %247 : vector<8x16x16xf32>
    %249 = arith.addf %244, %248 : vector<8x16x16xf32>
    %250 = vector.broadcast %10 : vector<8x1x1xf32> to vector<8x16x16xf32>
    %251 = arith.addf %249, %250 : vector<8x16x16xf32>
    %cst_70 = arith.constant dense<0xFF800000> : vector<8x16xf32>
    %252 = vector.multi_reduction <maximumf>, %251, %cst_70 [2] : vector<8x16x16xf32> to vector<8x16xf32>
    %253 = vector.shape_cast %252 : vector<8x16xf32> to vector<8x16x1xf32>
    %254 = vector.broadcast %253 : vector<8x16x1xf32> to vector<8x16x16xf32>
    %255 = arith.subf %251, %254 : vector<8x16x16xf32>
    %256 = math.exp %255 : vector<8x16x16xf32>
    %cst_71 = arith.constant dense<0.000000e+00> : vector<8x16xf32>
    %257 = vector.multi_reduction <add>, %256, %cst_71 [2] : vector<8x16x16xf32> to vector<8x16xf32>
    %258 = vector.shape_cast %257 : vector<8x16xf32> to vector<8x16x1xf32>
    %259 = tpu.reciprocal %258 : vector<8x16x1xf32> -> vector<8x16x1xf32>
    %260 = vector.broadcast %259 : vector<8x16x1xf32> to vector<8x16x16xf32>
    %261 = arith.mulf %256, %260 : vector<8x16x16xf32>
    %262 = arith.addf %261, %251 : vector<8x16x16xf32>
    %263 = vector.broadcast %11 : vector<8x1x1xf32> to vector<8x16x16xf32>
    %264 = arith.mulf %263, %262 : vector<8x16x16xf32>
    %265 = vector.extract_strided_slice %264 {offsets = [0, 0, 0], sizes = [1, 16, 16], strides = [1, 1, 1]} : vector<8x16x16xf32> to vector<1x16x16xf32>
    %266 = vector.shape_cast %265 : vector<1x16x16xf32> to vector<16x16xf32>
    %267 = vector.extract_strided_slice %264 {offsets = [1, 0, 0], sizes = [1, 16, 16], strides = [1, 1, 1]} : vector<8x16x16xf32> to vector<1x16x16xf32>
    %268 = vector.shape_cast %267 : vector<1x16x16xf32> to vector<16x16xf32>
    %269 = arith.addf %266, %268 : vector<16x16xf32>
    %270 = vector.extract_strided_slice %264 {offsets = [2, 0, 0], sizes = [1, 16, 16], strides = [1, 1, 1]} : vector<8x16x16xf32> to vector<1x16x16xf32>
    %271 = vector.shape_cast %270 : vector<1x16x16xf32> to vector<16x16xf32>
    %272 = arith.addf %269, %271 : vector<16x16xf32>
    %273 = vector.extract_strided_slice %264 {offsets = [3, 0, 0], sizes = [1, 16, 16], strides = [1, 1, 1]} : vector<8x16x16xf32> to vector<1x16x16xf32>
    %274 = vector.shape_cast %273 : vector<1x16x16xf32> to vector<16x16xf32>
    %275 = arith.addf %272, %274 : vector<16x16xf32>
    %276 = vector.extract_strided_slice %264 {offsets = [4, 0, 0], sizes = [1, 16, 16], strides = [1, 1, 1]} : vector<8x16x16xf32> to vector<1x16x16xf32>
    %277 = vector.shape_cast %276 : vector<1x16x16xf32> to vector<16x16xf32>
    %278 = arith.addf %275, %277 : vector<16x16xf32>
    %279 = vector.extract_strided_slice %264 {offsets = [5, 0, 0], sizes = [1, 16, 16], strides = [1, 1, 1]} : vector<8x16x16xf32> to vector<1x16x16xf32>
    %280 = vector.shape_cast %279 : vector<1x16x16xf32> to vector<16x16xf32>
    %281 = arith.addf %278, %280 : vector<16x16xf32>
    %282 = vector.extract_strided_slice %264 {offsets = [6, 0, 0], sizes = [1, 16, 16], strides = [1, 1, 1]} : vector<8x16x16xf32> to vector<1x16x16xf32>
    %283 = vector.shape_cast %282 : vector<1x16x16xf32> to vector<16x16xf32>
    %284 = arith.addf %281, %283 : vector<16x16xf32>
    %285 = vector.extract_strided_slice %264 {offsets = [7, 0, 0], sizes = [1, 16, 16], strides = [1, 1, 1]} : vector<8x16x16xf32> to vector<1x16x16xf32>
    %286 = vector.shape_cast %285 : vector<1x16x16xf32> to vector<16x16xf32>
    %287 = arith.addf %284, %286 : vector<16x16xf32>
    %288 = vector.broadcast %12 : vector<1x1xf32> to vector<16x16xf32>
    %289 = arith.addf %287, %288 : vector<16x16xf32>
    %290 = vector.shape_cast %261 : vector<8x16x16xf32> to vector<128x16xf32>
    %cst_72 = arith.constant dense<0.000000e+00> : vector<128x32xf32>
    %291 = tpu.matmul %290, %229, %cst_72 {dimension_numbers = #tpu.dot_dimension_numbers<[1], [0], [0], [1], [0, 0, 1, 1], [], []>} : vector<128x16xf32>, vector<16x32xf32>, vector<128x32xf32> -> vector<128x32xf32>
    %292 = tpu.iota {dimensions = array<i32: 0>} : vector<128x32xi32>
    %c4_i32_73 = arith.constant 4 : i32
    %293 = vector.broadcast %c4_i32_73 : i32 to vector<128x32xi32>
    %294 = arith.shrsi %292, %293 : vector<128x32xi32>
    %295 = tpu.iota {dimensions = array<i32: 1>} : vector<128x32xi32>
    %c2_i32_74 = arith.constant 2 : i32
    %296 = vector.broadcast %c2_i32_74 : i32 to vector<128x32xi32>
    %297 = arith.shrsi %295, %296 : vector<128x32xi32>
    %298 = arith.cmpi eq, %294, %297 : vector<128x32xi32>
    %cst_75 = arith.constant 0.000000e+00 : f32
    %299 = vector.broadcast %cst_75 : f32 to vector<128x32xf32>
    %300 = arith.select %298, %291, %299 : vector<128x32xi1>, vector<128x32xf32>
    %301 = vector.shape_cast %300 : vector<128x32xf32> to vector<8x16x32xf32>
    %302 = vector.extract_strided_slice %301 {offsets = [0, 0, 0], sizes = [1, 16, 32], strides = [1, 1, 1]} : vector<8x16x32xf32> to vector<1x16x32xf32>
    %303 = vector.shape_cast %302 : vector<1x16x32xf32> to vector<16x32xf32>
    %304 = vector.extract_strided_slice %301 {offsets = [1, 0, 0], sizes = [1, 16, 32], strides = [1, 1, 1]} : vector<8x16x32xf32> to vector<1x16x32xf32>
    %305 = vector.shape_cast %304 : vector<1x16x32xf32> to vector<16x32xf32>
    %306 = arith.addf %303, %305 : vector<16x32xf32>
    %307 = vector.extract_strided_slice %301 {offsets = [2, 0, 0], sizes = [1, 16, 32], strides = [1, 1, 1]} : vector<8x16x32xf32> to vector<1x16x32xf32>
    %308 = vector.shape_cast %307 : vector<1x16x32xf32> to vector<16x32xf32>
    %309 = arith.addf %306, %308 : vector<16x32xf32>
    %310 = vector.extract_strided_slice %301 {offsets = [3, 0, 0], sizes = [1, 16, 32], strides = [1, 1, 1]} : vector<8x16x32xf32> to vector<1x16x32xf32>
    %311 = vector.shape_cast %310 : vector<1x16x32xf32> to vector<16x32xf32>
    %312 = arith.addf %309, %311 : vector<16x32xf32>
    %313 = vector.extract_strided_slice %301 {offsets = [4, 0, 0], sizes = [1, 16, 32], strides = [1, 1, 1]} : vector<8x16x32xf32> to vector<1x16x32xf32>
    %314 = vector.shape_cast %313 : vector<1x16x32xf32> to vector<16x32xf32>
    %315 = arith.addf %312, %314 : vector<16x32xf32>
    %316 = vector.extract_strided_slice %301 {offsets = [5, 0, 0], sizes = [1, 16, 32], strides = [1, 1, 1]} : vector<8x16x32xf32> to vector<1x16x32xf32>
    %317 = vector.shape_cast %316 : vector<1x16x32xf32> to vector<16x32xf32>
    %318 = arith.addf %315, %317 : vector<16x32xf32>
    %319 = vector.extract_strided_slice %301 {offsets = [6, 0, 0], sizes = [1, 16, 32], strides = [1, 1, 1]} : vector<8x16x32xf32> to vector<1x16x32xf32>
    %320 = vector.shape_cast %319 : vector<1x16x32xf32> to vector<16x32xf32>
    %321 = arith.addf %318, %320 : vector<16x32xf32>
    %322 = vector.extract_strided_slice %301 {offsets = [7, 0, 0], sizes = [1, 16, 32], strides = [1, 1, 1]} : vector<8x16x32xf32> to vector<1x16x32xf32>
    %323 = vector.shape_cast %322 : vector<1x16x32xf32> to vector<16x32xf32>
    %324 = arith.addf %321, %323 : vector<16x32xf32>
    %cst_76 = arith.constant dense<0xFF800000> : vector<16xf32>
    %325 = vector.multi_reduction <maximumf>, %289, %cst_76 [1] : vector<16x16xf32> to vector<16xf32>
    %326 = vector.shape_cast %325 : vector<16xf32> to vector<16x1xf32>
    %327 = vector.broadcast %326 : vector<16x1xf32> to vector<16x16xf32>
    %328 = arith.subf %289, %327 : vector<16x16xf32>
    %329 = math.exp %328 : vector<16x16xf32>
    %cst_77 = arith.constant dense<0.000000e+00> : vector<16xf32>
    %330 = vector.multi_reduction <add>, %329, %cst_77 [1] : vector<16x16xf32> to vector<16xf32>
    %331 = vector.shape_cast %330 : vector<16xf32> to vector<16x1xf32>
    %332 = tpu.reciprocal %331 : vector<16x1xf32> -> vector<16x1xf32>
    %333 = vector.broadcast %332 : vector<16x1xf32> to vector<16x16xf32>
    %334 = arith.mulf %329, %333 : vector<16x16xf32>
    %335 = arith.mulf %334, %289 : vector<16x16xf32>
    %cst_78 = arith.constant dense<0.000000e+00> : vector<16xf32>
    %336 = vector.multi_reduction <add>, %335, %cst_78 [1] : vector<16x16xf32> to vector<16xf32>
    %337 = vector.shape_cast %336 : vector<16xf32> to vector<16x1xf32>
    %338 = vector.broadcast %337 : vector<16x1xf32> to vector<16x32xf32>
    %339 = vector.broadcast %5 : vector<1x32xf32> to vector<16x32xf32>
    %340 = arith.mulf %338, %339 : vector<16x32xf32>
    %341 = vector.broadcast %6 : vector<1x32xf32> to vector<16x32xf32>
    %342 = arith.addf %340, %341 : vector<16x32xf32>
    %343 = arith.addf %324, %342 : vector<16x32xf32>
    %cst_79 = arith.constant dense<0.000000e+00> : vector<16x32xf32>
    %344 = tpu.matmul %343, %1, %cst_79 {dimension_numbers = #tpu.dot_dimension_numbers<[1], [0], [0], [1], [0, 0, 1, 1], [], []>} : vector<16x32xf32>, vector<32x32xf32>, vector<16x32xf32> -> vector<16x32xf32>
    %345 = vector.broadcast %4 : vector<1x32xf32> to vector<16x32xf32>
    %346 = arith.addf %344, %345 : vector<16x32xf32>
    %c1_80 = arith.constant 1 : index
    %c0_81 = arith.constant 0 : index
    %c0_82 = arith.constant 0 : index
    %347 = vector.load %arg3[%c1_80, %c0_81, %c0_82] : memref<2x32x32xf32, #tpu.memory_space<vmem>>, vector<1x16x32xf32>
    %348 = vector.shape_cast %347 : vector<1x16x32xf32> to vector<16x32xf32>
    %349 = vector.shape_cast %346 : vector<16x32xf32> to vector<1x16x32xf32>
    tpu.vector_store %arg3[%c1_80, %c0_81, %c0_82], %349 {strides = array<i32>} : memref<2x32x32xf32, #tpu.memory_space<vmem>>, vector<1x16x32xf32>,
    %c1_83 = arith.constant 1 : index
    %c16_84 = arith.constant 16 : index
    %c0_85 = arith.constant 0 : index
    %350 = vector.load %arg3[%c1_83, %c16_84, %c0_85] : memref<2x32x32xf32, #tpu.memory_space<vmem>>, vector<1x16x16xf32>
    %351 = vector.shape_cast %350 : vector<1x16x16xf32> to vector<16x16xf32>
    %352 = vector.shape_cast %289 : vector<16x16xf32> to vector<1x16x16xf32>
    tpu.vector_store %arg3[%c1_83, %c16_84, %c0_85], %352 {strides = array<i32>} : memref<2x32x32xf32, #tpu.memory_space<vmem>>, vector<1x16x16xf32>,
    %cst_86 = arith.constant 0.000000e+00 : f32
    %353 = vector.broadcast %cst_86 : f32 to vector<16x16xf32>
    %c1_87 = arith.constant 1 : index
    %c16_88 = arith.constant 16 : index
    %c16_89 = arith.constant 16 : index
    %354 = vector.load %arg3[%c1_87, %c16_88, %c16_89] : memref<2x32x32xf32, #tpu.memory_space<vmem>>, vector<1x16x16xf32>
    %355 = vector.shape_cast %354 : vector<1x16x16xf32> to vector<16x16xf32>
    %356 = vector.shape_cast %353 : vector<16x16xf32> to vector<1x16x16xf32>
    tpu.vector_store %arg3[%c1_87, %c16_88, %c16_89], %356 {strides = array<i32>} : memref<2x32x32xf32, #tpu.memory_space<vmem>>, vector<1x16x16xf32>,
    return
  }
  func.func @transform_0(%arg0: i32) -> (i32, i32, i32) {
    %c0_i32 = arith.constant 0 : i32
    %c0_i32_0 = arith.constant 0 : i32
    %c0_i32_1 = arith.constant 0 : i32
    %c0_i32_2 = arith.constant 0 : i32
    return %c0_i32, %c0_i32_0, %c0_i32_1 : i32, i32, i32
  }
  func.func @transform_1(%arg0: i32) -> (i32, i32) {
    %c0_i32 = arith.constant 0 : i32
    %c0_i32_0 = arith.constant 0 : i32
    %c0_i32_1 = arith.constant 0 : i32
    return %c0_i32, %c0_i32_0 : i32, i32
  }
  func.func @transform_2(%arg0: i32) -> (i32, i32, i32) {
    %c0_i32 = arith.constant 0 : i32
    %c0_i32_0 = arith.constant 0 : i32
    %c0_i32_1 = arith.constant 0 : i32
    %c0_i32_2 = arith.constant 0 : i32
    return %c0_i32, %c0_i32_0, %c0_i32_1 : i32, i32, i32
  }
}

</mosaic_0001>

<llo_original>
// kernel: graph_propagation_attention.1
$region0: #{graph_propagation_attention.1}
  #allocation0 [shape = 'u32[]', space=smem, size = 0x4, offset = 0x4, fixed_abs, tag = 'smem constant byte address 0x4 - core index']
  #allocation1 [shape = 'u32[144,128]{1,0:T(1,128)}', space=vmem, size = 0x12000, scoped, tag = 'internal scratch']
  %s0 = inlined_call_operand.vmem [shape: f32[2,40,32], index: 0, kind: input, shape index: {}]
  %s1 = inlined_call_operand.vmem [shape: f32[40,128], index: 1, kind: input, shape index: {}]
  %s2 = inlined_call_operand.vmem [shape: f32[2,32,32], index: 2, kind: output, shape index: {}]
  %s3 = sld [smem:[#allocation0]]
  $region18: #{graph_propagation_attention.1} parent=0
    _
  %s5 = ssub.s32 1, %s3
  %s6 = scalar_select 0, %s5, %s3
  // Predicated region
  $region2: #{graph_propagation_attention.1} parent=0 // pred_check
    _
  $region3: #{graph_propagation_attention.1} parent=0 // pred_check_branch
    %8 = sbr.rel (0) target = $region5
  $region4: #{graph_propagation_attention.1} parent=0 // pred_region
    _
  $region5: #{graph_propagation_attention.1} parent=0 // pred_fallthru
    _
  // Predicated region
  $region6: #{graph_propagation_attention.1} parent=0 // pred_check
    _
  $region7: #{graph_propagation_attention.1} parent=0 // pred_check_branch
    %10 = sbr.rel (0) target = $region9
  $region8: #{graph_propagation_attention.1} parent=0 // pred_region
    _
  $region9: #{graph_propagation_attention.1} parent=0 // pred_fallthru
    _
  %v11 = vld [vmem:[%s1] sm:$0xff]
  %v12 = vld [vmem:[%s1 + $0x8] sm:$0xff]
  %v13 = vld [vmem:[%s1 + $0x10] sm:$0xff]
  %v14 = vld [vmem:[%s1 + $0x18] sm:$0xff]
  %v15 = vld [vmem:[%s1 + $0x20] sm:$0x1]
  %v16 = vld [vmem:[%s1 + $0x21] sm:$0x1]
  %v17 = vld [vmem:[%s1 + $0x22] sm:$0x1]
  %v18 = vld [vmem:[%s1 + $0x23] sm:$0x1]
  %v19 = vld [vmem:[%s1 + $0x24] sm:$0x1]
  %v20 = vld [vmem:[%s1 + $0x20] sm:$0xff]
  %v22 = vcombine.high %v20, %v20
  %v24 = vunpack.c.l.s4 1966171168
  %v25 = vunpack.c.0.s8 %v24
  %v26 = vlaneseq
  %v27 = vshrl.u32 %v26, 7
  %v28 = vsub.s32 %v25, %v27
  %v29 = vrot.slane %v20, %v28
  %v31 = vunpack.c.l.s4 1966171168
  %v32 = vunpack.c.0.s8 %v31
  %v33 = vlaneseq
  %v34 = vshrl.u32 %v33, 7
  %v35 = vsub.s32 %v32, %v34
  %v36 = vrot.slane %v22, %v35
  %v37 = vcombine.high %v29, %v29
  %v38 = vcombine.high %v36, %v36
  %v40 = vunpack.c.l.s4 1966171168
  %v41 = vunpack.c.0.s8 %v40
  %v42 = vlaneseq
  %v43 = vshrl.u32 %v42, 7
  %v44 = vsub.s32 %v41, %v43
  %v45 = vrot.slane %v29, %v44
  %v47 = vunpack.c.l.s4 1966171168
  %v48 = vunpack.c.0.s8 %v47
  %v49 = vlaneseq
  %v50 = vshrl.u32 %v49, 7
  %v51 = vsub.s32 %v48, %v50
  %v52 = vrot.slane %v36, %v51
  %v54 = vunpack.c.l.s4 1966171168
  %v55 = vunpack.c.0.s8 %v54
  %v56 = vlaneseq
  %v57 = vshrl.u32 %v56, 7
  %v58 = vsub.s32 %v55, %v57
  %v59 = vrot.slane %v37, %v58
  %v61 = vunpack.c.l.s4 1966171168
  %v62 = vunpack.c.0.s8 %v61
  %v63 = vlaneseq
  %v64 = vshrl.u32 %v63, 7
  %v65 = vsub.s32 %v62, %v64
  %v66 = vrot.slane %v38, %v65
  %v67 = vcombine.high %v45, %v45
  %v68 = vcombine.high %v52, %v52
  %v69 = vcombine.high %v59, %v59
  %v70 = vcombine.high %v66, %v66
  %v71 = vlaneseq
  %v72 = vshrl.u32 %v71, 7
  %v73 = vadd.s32 %v72, 8
  %v74 = vlaneseq
  %v75 = vand.u32 %v74, 127
  %v76 = vld [vmem:[%s0] sm:$0xff]
  %v77 = vld [vmem:[%s0 + $0x8] sm:$0xff]
  %v78 = vld [vmem:[%s0 + $0x10] sm:$0xff]
  %v79 = vld [vmem:[%s0 + $0x18] sm:$0xff]
  %v80 = vld [vmem:[%s0 + $0x20] sm:$0xff]
  %vm81 = vcmp.eq.s32.totalorder %v72, %v75
  %vm82 = vcmp.eq.s32.totalorder %v73, %v75
  %v83 = vsel %vm81, %v78, 0.0
  %v84 = vsel %vm82, %v79, 0.0
  %vm85 = vcmask 130048
  %v86 = vsel %vm85, %v83, 0.0
  %87 = vadd.xlane.f32.xlu0 %v86
  %v88 = vpop.xlane.xlu0 %87
  %v89 = vsel %vm85, %v84, 0.0
  %90 = vadd.xlane.f32.xlu0 %v89
  %v91 = vpop.xlane.xlu0 %90
  %vm92 = vcmask 261120
  %v93 = vsel %vm92, %v80, 0.0
  %v94 = vrot.slane %v93, 4
  %v95 = vadd.f32 %v93, %v94
  %v96 = vrot.slane %v95, 2
  %v97 = vadd.f32 %v95, %v96
  %v98 = vrot.slane %v97, 1
  %v99 = vadd.f32 %v97, %v98
  %v100 = vmul.f32 %v88, %v76
  %v101 = vmul.f32 %v91, %v77
  %v102 = vmul.f32 %v100, %v99
  %v103 = vmul.f32 %v101, %v99
  %v104 = vadd.f32 %v102, %v76
  %v105 = vadd.f32 %v103, %v77
  %v106 = vsel %vm92, %v104, 0.0
  %107 = vadd.xlane.f32.xlu0 %v106
  %v108 = vpop.xlane.xlu0 %107
  %v109 = vsel %vm92, %v105, 0.0
  %110 = vadd.xlane.f32.xlu0 %v109
  %v111 = vpop.xlane.xlu0 %110
  %v112 = vrcp.pop 32.0
  %v113 = vmul.f32 %v108, %v112
  %v114 = vmul.f32 %v111, %v112
  %v115 = vsub.f32 %v104, %v113
  %v116 = vsub.f32 %v105, %v114
  %v117 = vmul.f32 %v115, %v115
  %v118 = vmul.f32 %v116, %v116
  %v119 = vsel %vm92, %v117, 0.0
  %120 = vadd.xlane.f32.xlu0 %v119
  %v121 = vpop.xlane.xlu0 %120
  %v122 = vsel %vm92, %v118, 0.0
  %123 = vadd.xlane.f32.xlu0 %v122
  %v124 = vpop.xlane.xlu0 %123
  %v125 = vmul.f32 %v121, %v112
  %v126 = vmul.f32 %v124, %v112
  %v127 = vadd.f32 %v125, 1e-05
  %v128 = vadd.f32 %v126, 1e-05
  %v129 = vrsqrt.pop %v127
  %v130 = vrsqrt.pop %v128
  %v131 = vmul.f32 %v115, %v129
  %v132 = vmul.f32 %v116, %v130
  %v133 = vlaneseq
  %v134 = vshrl.u32 %v133, 7
  %v135 = vsub.s32 0, %v134
  %v136 = vrot.slane %v15, %v135
  %v137 = vmul.f32 %v131, %v136
  %v138 = vmul.f32 %v132, %v136
  %v139 = vlaneseq
  %v140 = vshrl.u32 %v139, 7
  %v141 = vsub.s32 0, %v140
  %v142 = vrot.slane %v16, %v141
  %v143 = vadd.f32 %v137, %v142
  %v144 = vadd.f32 %v138, %v142
  %v146 = vsel %vm92, %v143, 0
  %v149 = vsel %vm92, %v144, 0
  %151 = vmatprep.subr.mxu0 0.0
  %152 = vmatpush1.msra.mxu0 %v11
  %153 = vmatprep.subr.mxu0 0.0
  %154 = vmatpush1.msra.mxu0 %v12
  %155 = vmatprep.subr.mxu0 0.0
  %156 = vmatpush1.msra.mxu0 %v13
  %157 = vmatprep.subr.mxu0 0.0
  %158 = vmatpush1.msra.mxu0 %v14
  %159 = vmatprep.subr.mxu0 0.0
  %160 = vmatpush1.msra.mxu0 0.0
  %161 = vmatprep.subr.mxu0 0.0
  %162 = vmatpush1.msra.mxu0 0.0
  %163 = vmatprep.subr.mxu0 0.0
  %164 = vmatpush1.msra.mxu0 0.0
  %165 = vmatprep.subr.mxu0 0.0
  %166 = vmatpush1.msra.mxu0 0.0
  %167 = vmatprep.subr.mxu0 0.0
  %168 = vmatpush1.msra.mxu0 0.0
  %169 = vmatprep.subr.mxu0 0.0
  %170 = vmatpush1.msra.mxu0 0.0
  %171 = vmatprep.subr.mxu0 0.0
  %172 = vmatpush1.msra.mxu0 0.0
  %173 = vmatprep.subr.mxu0 0.0
  %174 = vmatpush1.msra.mxu0 0.0
  %175 = vmatprep.subr.mxu0 0.0
  %176 = vmatpush1.msra.mxu0 0.0
  %177 = vmatprep.subr.mxu0 0.0
  %178 = vmatpush1.msra.mxu0 0.0
  %179 = vmatprep.subr.mxu0 0.0
  %180 = vmatpush1.msra.mxu0 0.0
  %181 = vmatprep.subr.mxu0 0.0
  %182 = vmatpush1.msra.mxu0 0.0
  %183 = vmatprep.subr.mxu0 0.0
  %184 = vmatpush1.msra.mxu0 0.0
  %185 = vmatprep.subr.mxu0 0.0
  %186 = vmatpush1.msra.mxu0 0.0
  %187 = vmatprep.subr.mxu0 0.0
  %188 = vmatpush1.msra.mxu0 0.0
  %189 = vmatprep.subr.mxu0 0.0
  %190 = vmatpush1.msra.mxu0 0.0
  %191 = vmatprep.subr.mxu0 0.0
  %192 = vmatpush1.msra.mxu0 0.0
  %193 = vmatprep.subr.mxu0 0.0
  %194 = vmatpush1.msra.mxu0 0.0
  %195 = vmatprep.subr.mxu0 0.0
  %196 = vmatpush1.msra.mxu0 0.0
  %197 = vmatprep.subr.mxu0 0.0
  %198 = vmatpush1.msra.mxu0 0.0
  %199 = vmatprep.subr.mxu0 0.0
  %200 = vmatpush1.msra.mxu0 0.0
  %201 = vmatprep.subr.mxu0 0.0
  %202 = vmatpush1.msra.mxu0 0.0
  %203 = vmatprep.subr.mxu0 0.0
  %204 = vmatpush1.msra.mxu0 0.0
  %205 = vmatprep.subr.mxu0 0.0
  %206 = vmatpush1.msra.mxu0 0.0
  %207 = vmatprep.subr.mxu0 0.0
  %208 = vmatpush1.msra.mxu0 0.0
  %209 = vmatprep.subr.mxu0 0.0
  %210 = vmatpush1.msra.mxu0 0.0
  %211 = vmatprep.subr.mxu0 0.0
  %212 = vmatpush1.msra.mxu0 0.0
  %213 = vmatprep.subr.mxu0 0.0
  %214 = vmatpush1.msra.mxu0 0.0
  %215 = vmatprep.mubr.f32.mxu0 0.0
  %216 = vmatmul.mubr.f32.gmra.mrb[0].mxu0 %v146
  %v217 = vpop.f32.mrb[0].mxu0
  %v218 = vadd.f32 0.0, %v217
  %v219 = vpop.f32.mrb[0].mxu0
  %220 = vmatprep.mubr.f32.mxu0 0.0
  %221 = vmatmul.mubr.f32.gmra.mrb[0].mxu0 %v149
  %v222 = vpop.f32.mrb[0].mxu0
  %v223 = vadd.f32 0.0, %v222
  %v224 = vpop.f32.mrb[0].mxu0
  %225 = vdwg.mxu0
  %v226 = vadd.s32 %v72, 16
  %v227 = vadd.s32 %v72, 24
  %v228 = vadd.s32 %v72, 32
  %v229 = vadd.s32 %v72, 40
  %v230 = vadd.s32 %v72, 48
  %v231 = vadd.s32 %v72, 56
  %v232 = vadd.s32 %v72, 64
  %v233 = vadd.s32 %v72, 72
  %v234 = vadd.s32 %v72, 80
  %v235 = vadd.s32 %v72, 88
  %v236 = vadd.s32 %v72, 96
  %v237 = vadd.s32 %v72, 104
  %v238 = vadd.s32 %v72, 112
  %v239 = vadd.s32 %v72, 120
  %v240 = vshra.s32 %v72, 4
  %v241 = vshra.s32 %v73, 4
  %v242 = vshra.s32 %v226, 4
  %v243 = vshra.s32 %v227, 4
  %v244 = vshra.s32 %v228, 4
  %v245 = vshra.s32 %v229, 4
  %v246 = vshra.s32 %v230, 4
  %v247 = vshra.s32 %v231, 4
  %v248 = vshra.s32 %v232, 4
  %v249 = vshra.s32 %v233, 4
  %v250 = vshra.s32 %v234, 4
  %v251 = vshra.s32 %v235, 4
  %v252 = vshra.s32 %v236, 4
  %v253 = vshra.s32 %v237, 4
  %v254 = vshra.s32 %v238, 4
  %v255 = vshra.s32 %v239, 4
  %v256 = vshra.s32 %v75, 2
  %vm257 = vcmp.eq.s32.totalorder %v240, %v256
  %vm258 = vcmp.eq.s32.totalorder %v241, %v256
  %vm259 = vcmp.eq.s32.totalorder %v242, %v256
  %vm260 = vcmp.eq.s32.totalorder %v243, %v256
  %vm261 = vcmp.eq.s32.totalorder %v244, %v256
  %vm262 = vcmp.eq.s32.totalorder %v245, %v256
  %vm263 = vcmp.eq.s32.totalorder %v246, %v256
  %vm264 = vcmp.eq.s32.totalorder %v247, %v256
  %vm265 = vcmp.eq.s32.totalorder %v248, %v256
  %vm266 = vcmp.eq.s32.totalorder %v249, %v256
  %vm267 = vcmp.eq.s32.totalorder %v250, %v256
  %vm268 = vcmp.eq.s32.totalorder %v251, %v256
  %vm269 = vcmp.eq.s32.totalorder %v252, %v256
  %vm270 = vcmp.eq.s32.totalorder %v253, %v256
  %vm271 = vcmp.eq.s32.totalorder %v254, %v256
  %vm272 = vcmp.eq.s32.totalorder %v255, %v256
  %v273 = vsel %vm257, %v218, 0.0
  %v274 = vsel %vm258, %v223, 0.0
  %v275 = vsel %vm259, %v218, 0.0
  %v276 = vsel %vm260, %v223, 0.0
  %v277 = vsel %vm261, %v218, 0.0
  %v278 = vsel %vm262, %v223, 0.0
  %v279 = vsel %vm263, %v218, 0.0
  %v280 = vsel %vm264, %v223, 0.0
  %v281 = vsel %vm265, %v218, 0.0
  %v282 = vsel %vm266, %v223, 0.0
  %v283 = vsel %vm267, %v218, 0.0
  %v284 = vsel %vm268, %v223, 0.0
  %v285 = vsel %vm269, %v218, 0.0
  %v286 = vsel %vm270, %v223, 0.0
  %v287 = vsel %vm271, %v218, 0.0
  %v288 = vsel %vm272, %v223, 0.0
  %291 = vrot.lane.b32.xlu0 %v218, 96
  %v292 = vpop.permute.xlu0 %291
  %293 = vrot.lane.b32.xlu0 %v223, 96
  %v294 = vpop.permute.xlu0 %293
  %v296 = vsel %vm92, %v273, 0
  %v299 = vsel %vm92, %v274, 0
  %v302 = vsel %vm92, %v275, 0
  %v305 = vsel %vm92, %v276, 0
  %v308 = vsel %vm92, %v277, 0
  %v311 = vsel %vm92, %v278, 0
  %v314 = vsel %vm92, %v279, 0
  %v317 = vsel %vm92, %v280, 0
  %v320 = vsel %vm92, %v281, 0
  %v323 = vsel %vm92, %v282, 0
  %v326 = vsel %vm92, %v283, 0
  %v329 = vsel %vm92, %v284, 0
  %v332 = vsel %vm92, %v285, 0
  %v335 = vsel %vm92, %v286, 0
  %v338 = vsel %vm92, %v287, 0
  %v341 = vsel %vm92, %v288, 0
  %v343 = vsel %vm92, %v292, 0
  %v345 = vsel %vm92, %v294, 0
  %347 = vmatprep.subr.mxu0 0.0
  %348 = vmatpush1.xpose.msra.mxu0 %v343
  %349 = vmatprep.subr.mxu0 0.0
  %350 = vmatpush1.xpose.msra.mxu0 %v345
  %351 = vmatprep.subr.mxu0 0.0
  %352 = vmatpush1.xpose.msra.mxu0 0.0
  %353 = vmatprep.subr.mxu0 0.0
  %354 = vmatpush1.xpose.msra.mxu0 0.0
  %355 = vmatprep.subr.mxu0 0.0
  %356 = vmatpush1.xpose.msra.mxu0 0.0
  %357 = vmatprep.subr.mxu0 0.0
  %358 = vmatpush1.xpose.msra.mxu0 0.0
  %359 = vmatprep.subr.mxu0 0.0
  %360 = vmatpush1.xpose.msra.mxu0 0.0
  %361 = vmatprep.subr.mxu0 0.0
  %362 = vmatpush1.xpose.msra.mxu0 0.0
  %363 = vmatprep.subr.mxu0 0.0
  %364 = vmatpush1.xpose.msra.mxu0 0.0
  %365 = vmatprep.subr.mxu0 0.0
  %366 = vmatpush1.xpose.msra.mxu0 0.0
  %367 = vmatprep.subr.mxu0 0.0
  %368 = vmatpush1.xpose.msra.mxu0 0.0
  %369 = vmatprep.subr.mxu0 0.0
  %370 = vmatpush1.xpose.msra.mxu0 0.0
  %371 = vmatprep.subr.mxu0 0.0
  %372 = vmatpush1.xpose.msra.mxu0 0.0
  %373 = vmatprep.subr.mxu0 0.0
  %374 = vmatpush1.xpose.msra.mxu0 0.0
  %375 = vmatprep.subr.mxu0 0.0
  %376 = vmatpush1.xpose.msra.mxu0 0.0
  %377 = vmatprep.subr.mxu0 0.0
  %378 = vmatpush1.xpose.msra.mxu0 0.0
  %379 = vmatprep.subr.mxu0 0.0
  %380 = vmatpush1.xpose.msra.mxu0 0.0
  %381 = vmatprep.subr.mxu0 0.0
  %382 = vmatpush1.xpose.msra.mxu0 0.0
  %383 = vmatprep.subr.mxu0 0.0
  %384 = vmatpush1.xpose.msra.mxu0 0.0
  %385 = vmatprep.subr.mxu0 0.0
  %386 = vmatpush1.xpose.msra.mxu0 0.0
  %387 = vmatprep.subr.mxu0 0.0
  %388 = vmatpush1.xpose.msra.mxu0 0.0
  %389 = vmatprep.subr.mxu0 0.0
  %390 = vmatpush1.xpose.msra.mxu0 0.0
  %391 = vmatprep.subr.mxu0 0.0
  %392 = vmatpush1.xpose.msra.mxu0 0.0
  %393 = vmatprep.subr.mxu0 0.0
  %394 = vmatpush1.xpose.msra.mxu0 0.0
  %395 = vmatprep.subr.mxu0 0.0
  %396 = vmatpush1.xpose.msra.mxu0 0.0
  %397 = vmatprep.subr.mxu0 0.0
  %398 = vmatpush1.xpose.msra.mxu0 0.0
  %399 = vmatprep.subr.mxu0 0.0
  %400 = vmatpush1.xpose.msra.mxu0 0.0
  %401 = vmatprep.subr.mxu0 0.0
  %402 = vmatpush1.xpose.msra.mxu0 0.0
  %403 = vmatprep.subr.mxu0 0.0
  %404 = vmatpush1.xpose.msra.mxu0 0.0
  %405 = vmatprep.subr.mxu0 0.0
  %406 = vmatpush1.xpose.msra.mxu0 0.0
  %407 = vmatprep.subr.mxu0 0.0
  %408 = vmatpush1.xpose.msra.mxu0 0.0
  %409 = vmatprep.subr.mxu0 0.0
  %410 = vmatpush1.xpose.msra.mxu0 0.0
  %411 = vmatprep.mubr.f32.mxu0 0.0
  %412 = vmatmul.mubr.f32.gmra.mrb[0].mxu0 %v296
  %v413 = vpop.f32.mrb[0].mxu0
  %v414 = vadd.f32 0.0, %v413
  %v415 = vpop.f32.mrb[0].mxu0
  %416 = vmatprep.mubr.f32.mxu0 0.0
  %417 = vmatmul.mubr.f32.gmra.mrb[0].mxu0 %v299
  %v418 = vpop.f32.mrb[0].mxu0
  %v419 = vadd.f32 0.0, %v418
  %v420 = vpop.f32.mrb[0].mxu0
  %421 = vmatprep.mubr.f32.mxu0 0.0
  %422 = vmatmul.mubr.f32.gmra.mrb[0].mxu0 %v302
  %v423 = vpop.f32.mrb[0].mxu0
  %v424 = vadd.f32 0.0, %v423
  %v425 = vpop.f32.mrb[0].mxu0
  %426 = vmatprep.mubr.f32.mxu0 0.0
  %427 = vmatmul.mubr.f32.gmra.mrb[0].mxu0 %v305
  %v428 = vpop.f32.mrb[0].mxu0
  %v429 = vadd.f32 0.0, %v428
  %v430 = vpop.f32.mrb[0].mxu0
  %431 = vmatprep.mubr.f32.mxu0 0.0
  %432 = vmatmul.mubr.f32.gmra.mrb[0].mxu0 %v308
  %v433 = vpop.f32.mrb[0].mxu0
  %v434 = vadd.f32 0.0, %v433
  %v435 = vpop.f32.mrb[0].mxu0
  %436 = vmatprep.mubr.f32.mxu0 0.0
  %437 = vmatmul.mubr.f32.gmra.mrb[0].mxu0 %v311
  %v438 = vpop.f32.mrb[0].mxu0
  %v439 = vadd.f32 0.0, %v438
  %v440 = vpop.f32.mrb[0].mxu0
  %441 = vmatprep.mubr.f32.mxu0 0.0
  %442 = vmatmul.mubr.f32.gmra.mrb[0].mxu0 %v314
  %v443 = vpop.f32.mrb[0].mxu0
  %v444 = vadd.f32 0.0, %v443
  %v445 = vpop.f32.mrb[0].mxu0
  %446 = vmatprep.mubr.f32.mxu0 0.0
  %447 = vmatmul.mubr.f32.gmra.mrb[0].mxu0 %v317
  %v448 = vpop.f32.mrb[0].mxu0
  %v449 = vadd.f32 0.0, %v448
  %v450 = vpop.f32.mrb[0].mxu0
  %451 = vmatprep.mubr.f32.mxu0 0.0
  %452 = vmatmul.mubr.f32.gmra.mrb[0].mxu0 %v320
  %v453 = vpop.f32.mrb[0].mxu0
  %v454 = vadd.f32 0.0, %v453
  %v455 = vpop.f32.mrb[0].mxu0
  %456 = vmatprep.mubr.f32.mxu0 0.0
  %457 = vmatmul.mubr.f32.gmra.mrb[0].mxu0 %v323
  %v458 = vpop.f32.mrb[0].mxu0
  %v459 = vadd.f32 0.0, %v458
  %v460 = vpop.f32.mrb[0].mxu0
  %461 = vmatprep.mubr.f32.mxu0 0.0
  %462 = vmatmul.mubr.f32.gmra.mrb[0].mxu0 %v326
  %v463 = vpop.f32.mrb[0].mxu0
  %v464 = vadd.f32 0.0, %v463
  %v465 = vpop.f32.mrb[0].mxu0
  %466 = vmatprep.mubr.f32.mxu0 0.0
  %467 = vmatmul.mubr.f32.gmra.mrb[0].mxu0 %v329
  %v468 = vpop.f32.mrb[0].mxu0
  %v469 = vadd.f32 0.0, %v468
  %v470 = vpop.f32.mrb[0].mxu0
  %471 = vmatprep.mubr.f32.mxu0 0.0
  %472 = vmatmul.mubr.f32.gmra.mrb[0].mxu0 %v332
  %v473 = vpop.f32.mrb[0].mxu0
  %v474 = vadd.f32 0.0, %v473
  %v475 = vpop.f32.mrb[0].mxu0
  %476 = vmatprep.mubr.f32.mxu0 0.0
  %477 = vmatmul.mubr.f32.gmra.mrb[0].mxu0 %v335
  %v478 = vpop.f32.mrb[0].mxu0
  %v479 = vadd.f32 0.0, %v478
  %v480 = vpop.f32.mrb[0].mxu0
  %481 = vmatprep.mubr.f32.mxu0 0.0
  %482 = vmatmul.mubr.f32.gmra.mrb[0].mxu0 %v338
  %v483 = vpop.f32.mrb[0].mxu0
  %v484 = vadd.f32 0.0, %v483
  %v485 = vpop.f32.mrb[0].mxu0
  %486 = vmatprep.mubr.f32.mxu0 0.0
  %487 = vmatmul.mubr.f32.gmra.mrb[0].mxu0 %v341
  %v488 = vpop.f32.mrb[0].mxu0
  %v489 = vadd.f32 0.0, %v488
  %v490 = vpop.f32.mrb[0].mxu0
  %491 = vdwg.mxu0
  %v492 = vlaneseq
  %v493 = vshrl.u32 %v492, 7
  %v494 = vsub.s32 0, %v493
  %v495 = vrot.slane %v45, %v494
  %v496 = vlaneseq
  %v497 = vshrl.u32 %v496, 7
  %v498 = vsub.s32 0, %v497
  %v499 = vrot.slane %v59, %v498
  %v500 = vlaneseq
  %v501 = vshrl.u32 %v500, 7
  %v502 = vsub.s32 0, %v501
  %v503 = vrot.slane %v67, %v502
  %v504 = vlaneseq
  %v505 = vshrl.u32 %v504, 7
  %v506 = vsub.s32 0, %v505
  %v507 = vrot.slane %v69, %v506
  %v508 = vlaneseq
  %v509 = vshrl.u32 %v508, 7
  %v510 = vsub.s32 0, %v509
  %v511 = vrot.slane %v52, %v510
  %v512 = vlaneseq
  %v513 = vshrl.u32 %v512, 7
  %v514 = vsub.s32 0, %v513
  %v515 = vrot.slane %v66, %v514
  %v516 = vlaneseq
  %v517 = vshrl.u32 %v516, 7
  %v518 = vsub.s32 0, %v517
  %v519 = vrot.slane %v68, %v518
  %v520 = vlaneseq
  %v521 = vshrl.u32 %v520, 7
  %v522 = vsub.s32 0, %v521
  %v523 = vrot.slane %v70, %v522
  %524 = vset.pattern.permute.xlu0 32
  %525 = vperm.xlu0 %524, %v495
  %v526 = vpop.permute.xlu0 %525
  %528 = vset.pattern.permute.xlu0 32
  %529 = vperm.xlu0 %528, %v499
  %v530 = vpop.permute.xlu0 %529
  %532 = vset.pattern.permute.xlu0 32
  %533 = vperm.xlu0 %532, %v503
  %v534 = vpop.permute.xlu0 %533
  %536 = vset.pattern.permute.xlu0 32
  %537 = vperm.xlu0 %536, %v507
  %v538 = vpop.permute.xlu0 %537
  %540 = vset.pattern.permute.xlu0 32
  %541 = vperm.xlu0 %540, %v511
  %v542 = vpop.permute.xlu0 %541
  %544 = vset.pattern.permute.xlu0 32
  %545 = vperm.xlu0 %544, %v515
  %v546 = vpop.permute.xlu0 %545
  %548 = vset.pattern.permute.xlu0 32
  %549 = vperm.xlu0 %548, %v519
  %v550 = vpop.permute.xlu0 %549
  %552 = vset.pattern.permute.xlu0 32
  %553 = vperm.xlu0 %552, %v523
  %v554 = vpop.permute.xlu0 %553
  %v556 = vmul.f32 %v526, %v78
  %v557 = vmul.f32 %v526, %v79
  %v558 = vmul.f32 %v530, %v78
  %v559 = vmul.f32 %v530, %v79
  %v560 = vmul.f32 %v534, %v78
  %v561 = vmul.f32 %v534, %v79
  %v562 = vmul.f32 %v538, %v78
  %v563 = vmul.f32 %v538, %v79
  %v564 = vmul.f32 %v542, %v78
  %v565 = vmul.f32 %v542, %v79
  %v566 = vmul.f32 %v546, %v78
  %v567 = vmul.f32 %v546, %v79
  %v568 = vmul.f32 %v550, %v78
  %v569 = vmul.f32 %v550, %v79
  %v570 = vmul.f32 %v554, %v78
  %v571 = vmul.f32 %v554, %v79
  %v572 = vadd.f32 %v414, %v556
  %v573 = vadd.f32 %v419, %v557
  %v574 = vadd.f32 %v424, %v558
  %v575 = vadd.f32 %v429, %v559
  %v576 = vadd.f32 %v434, %v560
  %v577 = vadd.f32 %v439, %v561
  %v578 = vadd.f32 %v444, %v562
  %v579 = vadd.f32 %v449, %v563
  %v580 = vadd.f32 %v454, %v564
  %v581 = vadd.f32 %v459, %v565
  %v582 = vadd.f32 %v464, %v566
  %v583 = vadd.f32 %v469, %v567
  %v584 = vadd.f32 %v474, %v568
  %v585 = vadd.f32 %v479, %v569
  %v586 = vadd.f32 %v484, %v570
  %v587 = vadd.f32 %v489, %v571
  %588 = vset.pattern.permute.xlu0 33
  %589 = vperm.xlu0 %588, %v495
  %v590 = vpop.permute.xlu0 %589
  %592 = vset.pattern.permute.xlu0 33
  %593 = vperm.xlu0 %592, %v499
  %v594 = vpop.permute.xlu0 %593
  %596 = vset.pattern.permute.xlu0 33
  %597 = vperm.xlu0 %596, %v503
  %v598 = vpop.permute.xlu0 %597
  %600 = vset.pattern.permute.xlu0 33
  %601 = vperm.xlu0 %600, %v507
  %v602 = vpop.permute.xlu0 %601
  %604 = vset.pattern.permute.xlu0 33
  %605 = vperm.xlu0 %604, %v511
  %v606 = vpop.permute.xlu0 %605
  %608 = vset.pattern.permute.xlu0 33
  %609 = vperm.xlu0 %608, %v515
  %v610 = vpop.permute.xlu0 %609
  %612 = vset.pattern.permute.xlu0 33
  %613 = vperm.xlu0 %612, %v519
  %v614 = vpop.permute.xlu0 %613
  %616 = vset.pattern.permute.xlu0 33
  %617 = vperm.xlu0 %616, %v523
  %v618 = vpop.permute.xlu0 %617
  %v620 = vadd.f32 %v572, %v590
  %v621 = vadd.f32 %v573, %v590
  %v622 = vadd.f32 %v574, %v594
  %v623 = vadd.f32 %v575, %v594
  %v624 = vadd.f32 %v576, %v598
  %v625 = vadd.f32 %v577, %v598
  %v626 = vadd.f32 %v578, %v602
  %v627 = vadd.f32 %v579, %v602
  %v628 = vadd.f32 %v580, %v606
  %v629 = vadd.f32 %v581, %v606
  %v630 = vadd.f32 %v582, %v610
  %v631 = vadd.f32 %v583, %v610
  %v632 = vadd.f32 %v584, %v614
  %v633 = vadd.f32 %v585, %v614
  %v634 = vadd.f32 %v586, %v618
  %v635 = vadd.f32 %v587, %v618
  %v636 = vsel %vm85, %v620, -inf
  %637 = vmax.xlane.f32.xlu0 %v636
  %v638 = vpop.xlane.xlu0 %637
  %v639 = vsel %vm85, %v621, -inf
  %640 = vmax.xlane.f32.xlu0 %v639
  %v641 = vpop.xlane.xlu0 %640
  %v642 = vsel %vm85, %v622, -inf
  %643 = vmax.xlane.f32.xlu0 %v642
  %v644 = vpop.xlane.xlu0 %643
  %v645 = vsel %vm85, %v623, -inf
  %646 = vmax.xlane.f32.xlu0 %v645
  %v647 = vpop.xlane.xlu0 %646
  %v648 = vsel %vm85, %v624, -inf
  %649 = vmax.xlane.f32.xlu0 %v648
  %v650 = vpop.xlane.xlu0 %649
  %v651 = vsel %vm85, %v625, -inf
  %652 = vmax.xlane.f32.xlu0 %v651
  %v653 = vpop.xlane.xlu0 %652
  %v654 = vsel %vm85, %v626, -inf
  %655 = vmax.xlane.f32.xlu0 %v654
  %v656 = vpop.xlane.xlu0 %655
  %v657 = vsel %vm85, %v627, -inf
  %658 = vmax.xlane.f32.xlu0 %v657
  %v659 = vpop.xlane.xlu0 %658
  %v660 = vsel %vm85, %v628, -inf
  %661 = vmax.xlane.f32.xlu0 %v660
  %v662 = vpop.xlane.xlu0 %661
  %v663 = vsel %vm85, %v629, -inf
  %664 = vmax.xlane.f32.xlu0 %v663
  %v665 = vpop.xlane.xlu0 %664
  %v666 = vsel %vm85, %v630, -inf
  %667 = vmax.xlane.f32.xlu0 %v666
  %v668 = vpop.xlane.xlu0 %667
  %v669 = vsel %vm85, %v631, -inf
  %670 = vmax.xlane.f32.xlu0 %v669
  %v671 = vpop.xlane.xlu0 %670
  %v672 = vsel %vm85, %v632, -inf
  %673 = vmax.xlane.f32.xlu0 %v672
  %v674 = vpop.xlane.xlu0 %673
  %v675 = vsel %vm85, %v633, -inf
  %676 = vmax.xlane.f32.xlu0 %v675
  %v677 = vpop.xlane.xlu0 %676
  %v678 = vsel %vm85, %v634, -inf
  %679 = vmax.xlane.f32.xlu0 %v678
  %v680 = vpop.xlane.xlu0 %679
  %v681 = vsel %vm85, %v635, -inf
  %682 = vmax.xlane.f32.xlu0 %v681
  %v683 = vpop.xlane.xlu0 %682
  %v684 = vsub.f32 %v620, %v638
  %v685 = vsub.f32 %v621, %v641
  %v686 = vsub.f32 %v622, %v644
  %v687 = vsub.f32 %v623, %v647
  %v688 = vsub.f32 %v624, %v650
  %v689 = vsub.f32 %v625, %v653
  %v690 = vsub.f32 %v626, %v656
  %v691 = vsub.f32 %v627, %v659
  %v692 = vsub.f32 %v628, %v662
  %v693 = vsub.f32 %v629, %v665
  %v694 = vsub.f32 %v630, %v668
  %v695 = vsub.f32 %v631, %v671
  %v696 = vsub.f32 %v632, %v674
  %v697 = vsub.f32 %v633, %v677
  %v698 = vsub.f32 %v634, %v680
  %v699 = vsub.f32 %v635, %v683
  %v700 = vmul.f32 %v684, 1.442695
  %v701 = vpow.pop %v700
  %v702 = vmul.f32 %v685, 1.442695
  %v703 = vpow.pop %v702
  %v704 = vmul.f32 %v686, 1.442695
  %v705 = vpow.pop %v704
  %v706 = vmul.f32 %v687, 1.442695
  %v707 = vpow.pop %v706
  %v708 = vmul.f32 %v688, 1.442695
  %v709 = vpow.pop %v708
  %v710 = vmul.f32 %v689, 1.442695
  %v711 = vpow.pop %v710
  %v712 = vmul.f32 %v690, 1.442695
  %v713 = vpow.pop %v712
  %v714 = vmul.f32 %v691, 1.442695
  %v715 = vpow.pop %v714
  %v716 = vmul.f32 %v692, 1.442695
  %v717 = vpow.pop %v716
  %v718 = vmul.f32 %v693, 1.442695
  %v719 = vpow.pop %v718
  %v720 = vmul.f32 %v694, 1.442695
  %v721 = vpow.pop %v720
  %v722 = vmul.f32 %v695, 1.442695
  %v723 = vpow.pop %v722
  %v724 = vmul.f32 %v696, 1.442695
  %v725 = vpow.pop %v724
  %v726 = vmul.f32 %v697, 1.442695
  %v727 = vpow.pop %v726
  %v728 = vmul.f32 %v698, 1.442695
  %v729 = vpow.pop %v728
  %v730 = vmul.f32 %v699, 1.442695
  %v731 = vpow.pop %v730
  %v732 = vsel %vm85, %v701, 0.0
  %733 = vadd.xlane.f32.xlu0 %v732
  %v734 = vpop.xlane.xlu0 %733
  %v735 = vsel %vm85, %v703, 0.0
  %736 = vadd.xlane.f32.xlu0 %v735
  %v737 = vpop.xlane.xlu0 %736
  %v738 = vsel %vm85, %v705, 0.0
  %739 = vadd.xlane.f32.xlu0 %v738
  %v740 = vpop.xlane.xlu0 %739
  %v741 = vsel %vm85, %v707, 0.0
  %742 = vadd.xlane.f32.xlu0 %v741
  %v743 = vpop.xlane.xlu0 %742
  %v744 = vsel %vm85, %v709, 0.0
  %745 = vadd.xlane.f32.xlu0 %v744
  %v746 = vpop.xlane.xlu0 %745
  %v747 = vsel %vm85, %v711, 0.0
  %748 = vadd.xlane.f32.xlu0 %v747
  %v749 = vpop.xlane.xlu0 %748
  %v750 = vsel %vm85, %v713, 0.0
  %751 = vadd.xlane.f32.xlu0 %v750
  %v752 = vpop.xlane.xlu0 %751
  %v753 = vsel %vm85, %v715, 0.0
  %754 = vadd.xlane.f32.xlu0 %v753
  %v755 = vpop.xlane.xlu0 %754
  %v756 = vsel %vm85, %v717, 0.0
  %757 = vadd.xlane.f32.xlu0 %v756
  %v758 = vpop.xlane.xlu0 %757
  %v759 = vsel %vm85, %v719, 0.0
  %760 = vadd.xlane.f32.xlu0 %v759
  %v761 = vpop.xlane.xlu0 %760
  %v762 = vsel %vm85, %v721, 0.0
  %763 = vadd.xlane.f32.xlu0 %v762
  %v764 = vpop.xlane.xlu0 %763
  %v765 = vsel %vm85, %v723, 0.0
  %766 = vadd.xlane.f32.xlu0 %v765
  %v767 = vpop.xlane.xlu0 %766
  %v768 = vsel %vm85, %v725, 0.0
  %769 = vadd.xlane.f32.xlu0 %v768
  %v770 = vpop.xlane.xlu0 %769
  %v771 = vsel %vm85, %v727, 0.0
  %772 = vadd.xlane.f32.xlu0 %v771
  %v773 = vpop.xlane.xlu0 %772
  %v774 = vsel %vm85, %v729, 0.0
  %775 = vadd.xlane.f32.xlu0 %v774
  %v776 = vpop.xlane.xlu0 %775
  %v777 = vsel %vm85, %v731, 0.0
  %778 = vadd.xlane.f32.xlu0 %v777
  %v779 = vpop.xlane.xlu0 %778
  %v780 = vrcp.pop %v734
  %v781 = vrcp.pop %v737
  %v782 = vrcp.pop %v740
  %v783 = vrcp.pop %v743
  %v784 = vrcp.pop %v746
  %v785 = vrcp.pop %v749
  %v786 = vrcp.pop %v752
  %v787 = vrcp.pop %v755
  %v788 = vrcp.pop %v758
  %v789 = vrcp.pop %v761
  %v790 = vrcp.pop %v764
  %v791 = vrcp.pop %v767
  %v792 = vrcp.pop %v770
  %v793 = vrcp.pop %v773
  %v794 = vrcp.pop %v776
  %v795 = vrcp.pop %v779
  %v796 = vmul.f32 %v701, %v780
  %v797 = vmul.f32 %v703, %v781
  %v798 = vmul.f32 %v705, %v782
  %v799 = vmul.f32 %v707, %v783
  %v800 = vmul.f32 %v709, %v784
  %v801 = vmul.f32 %v711, %v785
  %v802 = vmul.f32 %v713, %v786
  %v803 = vmul.f32 %v715, %v787
  %v804 = vmul.f32 %v717, %v788
  %v805 = vmul.f32 %v719, %v789
  %v806 = vmul.f32 %v721, %v790
  %v807 = vmul.f32 %v723, %v791
  %v808 = vmul.f32 %v725, %v792
  %v809 = vmul.f32 %v727, %v793
  %v810 = vmul.f32 %v729, %v794
  %v811 = vmul.f32 %v731, %v795
  %v812 = vadd.f32 %v796, %v620
  %v813 = vadd.f32 %v797, %v621
  %v814 = vadd.f32 %v798, %v622
  %v815 = vadd.f32 %v799, %v623
  %v816 = vadd.f32 %v800, %v624
  %v817 = vadd.f32 %v801, %v625
  %v818 = vadd.f32 %v802, %v626
  %v819 = vadd.f32 %v803, %v627
  %v820 = vadd.f32 %v804, %v628
  %v821 = vadd.f32 %v805, %v629
  %v822 = vadd.f32 %v806, %v630
  %v823 = vadd.f32 %v807, %v631
  %v824 = vadd.f32 %v808, %v632
  %v825 = vadd.f32 %v809, %v633
  %v826 = vadd.f32 %v810, %v634
  %v827 = vadd.f32 %v811, %v635
  %828 = vset.pattern.permute.xlu0 34
  %829 = vperm.xlu0 %828, %v495
  %v830 = vpop.permute.xlu0 %829
  %832 = vset.pattern.permute.xlu0 34
  %833 = vperm.xlu0 %832, %v499
  %v834 = vpop.permute.xlu0 %833
  %836 = vset.pattern.permute.xlu0 34
  %837 = vperm.xlu0 %836, %v503
  %v838 = vpop.permute.xlu0 %837
  %840 = vset.pattern.permute.xlu0 34
  %841 = vperm.xlu0 %840, %v507
  %v842 = vpop.permute.xlu0 %841
  %844 = vset.pattern.permute.xlu0 34
  %845 = vperm.xlu0 %844, %v511
  %v846 = vpop.permute.xlu0 %845
  %848 = vset.pattern.permute.xlu0 34
  %849 = vperm.xlu0 %848, %v515
  %v850 = vpop.permute.xlu0 %849
  %852 = vset.pattern.permute.xlu0 34
  %853 = vperm.xlu0 %852, %v519
  %v854 = vpop.permute.xlu0 %853
  %856 = vset.pattern.permute.xlu0 34
  %857 = vperm.xlu0 %856, %v523
  %v858 = vpop.permute.xlu0 %857
  %v860 = vmul.f32 %v830, %v812
  %v861 = vmul.f32 %v830, %v813
  %v862 = vmul.f32 %v834, %v814
  %v863 = vmul.f32 %v834, %v815
  %v864 = vmul.f32 %v838, %v816
  %v865 = vmul.f32 %v838, %v817
  %v866 = vmul.f32 %v842, %v818
  %v867 = vmul.f32 %v842, %v819
  %v868 = vmul.f32 %v846, %v820
  %v869 = vmul.f32 %v846, %v821
  %v870 = vmul.f32 %v850, %v822
  %v871 = vmul.f32 %v850, %v823
  %v872 = vmul.f32 %v854, %v824
  %v873 = vmul.f32 %v854, %v825
  %v874 = vmul.f32 %v858, %v826
  %v875 = vmul.f32 %v858, %v827
  %v876 = vadd.f32 %v860, %v862
  %v877 = vadd.f32 %v861, %v863
  %v878 = vadd.f32 %v876, %v864
  %v879 = vadd.f32 %v877, %v865
  %v880 = vadd.f32 %v878, %v866
  %v881 = vadd.f32 %v879, %v867
  %v882 = vadd.f32 %v880, %v868
  %v883 = vadd.f32 %v881, %v869
  %v884 = vadd.f32 %v882, %v870
  %v885 = vadd.f32 %v883, %v871
  %v886 = vadd.f32 %v884, %v872
  %v887 = vadd.f32 %v885, %v873
  %v888 = vadd.f32 %v886, %v874
  %v889 = vadd.f32 %v887, %v875
  %891 = vrot.lane.b32.xlu0 %v15, 93
  %v892 = vpop.permute.xlu0 %891
  %s893 = vtos %v892
  %v894 = vstv %s893
  %v896 = vadd.f32 %v888, %v894
  %v897 = vadd.f32 %v889, %v894
  %898 = vrot.lane.b32.xlu0 %v218, 64
  %v899 = vpop.permute.xlu0 %898
  %900 = vrot.lane.b32.xlu0 %v223, 64
  %v901 = vpop.permute.xlu0 %900
  %v905 = vsel %vm85, %v796, 0
  %v908 = vsel %vm85, %v797, 0
  %v911 = vsel %vm85, %v798, 0
  %v914 = vsel %vm85, %v799, 0
  %v917 = vsel %vm85, %v800, 0
  %v920 = vsel %vm85, %v801, 0
  %v923 = vsel %vm85, %v802, 0
  %v926 = vsel %vm85, %v803, 0
  %v929 = vsel %vm85, %v804, 0
  %v932 = vsel %vm85, %v805, 0
  %v935 = vsel %vm85, %v806, 0
  %v938 = vsel %vm85, %v807, 0
  %v941 = vsel %vm85, %v808, 0
  %v944 = vsel %vm85, %v809, 0
  %v947 = vsel %vm85, %v810, 0
  %v950 = vsel %vm85, %v811, 0
  %952 = vmatprep.subr.mxu0 0.0
  %953 = vmatpush1.msra.mxu0 %v899
  %954 = vmatprep.subr.mxu0 0.0
  %955 = vmatpush1.msra.mxu0 %v901
  %956 = vmatprep.subr.mxu0 0.0
  %957 = vmatpush1.msra.mxu0 0.0
  %958 = vmatprep.subr.mxu0 0.0
  %959 = vmatpush1.msra.mxu0 0.0
  %960 = vmatprep.subr.mxu0 0.0
  %961 = vmatpush1.msra.mxu0 0.0
  %962 = vmatprep.subr.mxu0 0.0
  %963 = vmatpush1.msra.mxu0 0.0
  %964 = vmatprep.subr.mxu0 0.0
  %965 = vmatpush1.msra.mxu0 0.0
  %966 = vmatprep.subr.mxu0 0.0
  %967 = vmatpush1.msra.mxu0 0.0
  %968 = vmatprep.subr.mxu0 0.0
  %969 = vmatpush1.msra.mxu0 0.0
  %970 = vmatprep.subr.mxu0 0.0
  %971 = vmatpush1.msra.mxu0 0.0
  %972 = vmatprep.subr.mxu0 0.0
  %973 = vmatpush1.msra.mxu0 0.0
  %974 = vmatprep.subr.mxu0 0.0
  %975 = vmatpush1.msra.mxu0 0.0
  %976 = vmatprep.subr.mxu0 0.0
  %977 = vmatpush1.msra.mxu0 0.0
  %978 = vmatprep.subr.mxu0 0.0
  %979 = vmatpush1.msra.mxu0 0.0
  %980 = vmatprep.subr.mxu0 0.0
  %981 = vmatpush1.msra.mxu0 0.0
  %982 = vmatprep.subr.mxu0 0.0
  %983 = vmatpush1.msra.mxu0 0.0
  %984 = vmatprep.subr.mxu0 0.0
  %985 = vmatpush1.msra.mxu0 0.0
  %986 = vmatprep.subr.mxu0 0.0
  %987 = vmatpush1.msra.mxu0 0.0
  %988 = vmatprep.subr.mxu0 0.0
  %989 = vmatpush1.msra.mxu0 0.0
  %990 = vmatprep.subr.mxu0 0.0
  %991 = vmatpush1.msra.mxu0 0.0
  %992 = vmatprep.subr.mxu0 0.0
  %993 = vmatpush1.msra.mxu0 0.0
  %994 = vmatprep.subr.mxu0 0.0
  %995 = vmatpush1.msra.mxu0 0.0
  %996 = vmatprep.subr.mxu0 0.0
  %997 = vmatpush1.msra.mxu0 0.0
  %998 = vmatprep.subr.mxu0 0.0
  %999 = vmatpush1.msra.mxu0 0.0
  %1000 = vmatprep.subr.mxu0 0.0
  %1001 = vmatpush1.msra.mxu0 0.0
  %1002 = vmatprep.subr.mxu0 0.0
  %1003 = vmatpush1.msra.mxu0 0.0
  %1004 = vmatprep.subr.mxu0 0.0
  %1005 = vmatpush1.msra.mxu0 0.0
  %1006 = vmatprep.subr.mxu0 0.0
  %1007 = vmatpush1.msra.mxu0 0.0
  %1008 = vmatprep.subr.mxu0 0.0
  %1009 = vmatpush1.msra.mxu0 0.0
  %1010 = vmatprep.subr.mxu0 0.0
  %1011 = vmatpush1.msra.mxu0 0.0
  %1012 = vmatprep.subr.mxu0 0.0
  %1013 = vmatpush1.msra.mxu0 0.0
  %1014 = vmatprep.subr.mxu0 0.0
  %1015 = vmatpush1.msra.mxu0 0.0
  %1016 = vmatprep.mubr.f32.mxu0 0.0
  %1017 = vmatmul.mubr.f32.gmra.mrb[0].mxu0 %v905
  %v1018 = vpop.f32.mrb[0].mxu0
  %v1019 = vadd.f32 0.0, %v1018
  %v1020 = vpop.f32.mrb[0].mxu0
  %1021 = vmatprep.mubr.f32.mxu0 0.0
  %1022 = vmatmul.mubr.f32.gmra.mrb[0].mxu0 %v908
  %v1023 = vpop.f32.mrb[0].mxu0
  %v1024 = vadd.f32 0.0, %v1023
  %v1025 = vpop.f32.mrb[0].mxu0
  %1026 = vmatprep.mubr.f32.mxu0 0.0
  %1027 = vmatmul.mubr.f32.gmra.mrb[0].mxu0 %v911
  %v1028 = vpop.f32.mrb[0].mxu0
  %v1029 = vadd.f32 0.0, %v1028
  %v1030 = vpop.f32.mrb[0].mxu0
  %1031 = vmatprep.mubr.f32.mxu0 0.0
  %1032 = vmatmul.mubr.f32.gmra.mrb[0].mxu0 %v914
  %v1033 = vpop.f32.mrb[0].mxu0
  %v1034 = vadd.f32 0.0, %v1033
  %v1035 = vpop.f32.mrb[0].mxu0
  %1036 = vmatprep.mubr.f32.mxu0 0.0
  %1037 = vmatmul.mubr.f32.gmra.mrb[0].mxu0 %v917
  %v1038 = vpop.f32.mrb[0].mxu0
  %v1039 = vadd.f32 0.0, %v1038
  %v1040 = vpop.f32.mrb[0].mxu0
  %1041 = vmatprep.mubr.f32.mxu0 0.0
  %1042 = vmatmul.mubr.f32.gmra.mrb[0].mxu0 %v920
  %v1043 = vpop.f32.mrb[0].mxu0
  %v1044 = vadd.f32 0.0, %v1043
  %v1045 = vpop.f32.mrb[0].mxu0
  %1046 = vmatprep.mubr.f32.mxu0 0.0
  %1047 = vmatmul.mubr.f32.gmra.mrb[0].mxu0 %v923
  %v1048 = vpop.f32.mrb[0].mxu0
  %v1049 = vadd.f32 0.0, %v1048
  %v1050 = vpop.f32.mrb[0].mxu0
  %1051 = vmatprep.mubr.f32.mxu0 0.0
  %1052 = vmatmul.mubr.f32.gmra.mrb[0].mxu0 %v926
  %v1053 = vpop.f32.mrb[0].mxu0
  %v1054 = vadd.f32 0.0, %v1053
  %v1055 = vpop.f32.mrb[0].mxu0
  %1056 = vmatprep.mubr.f32.mxu0 0.0
  %1057 = vmatmul.mubr.f32.gmra.mrb[0].mxu0 %v929
  %v1058 = vpop.f32.mrb[0].mxu0
  %v1059 = vadd.f32 0.0, %v1058
  %v1060 = vpop.f32.mrb[0].mxu0
  %1061 = vmatprep.mubr.f32.mxu0 0.0
  %1062 = vmatmul.mubr.f32.gmra.mrb[0].mxu0 %v932
  %v1063 = vpop.f32.mrb[0].mxu0
  %v1064 = vadd.f32 0.0, %v1063
  %v1065 = vpop.f32.mrb[0].mxu0
  %1066 = vmatprep.mubr.f32.mxu0 0.0
  %1067 = vmatmul.mubr.f32.gmra.mrb[0].mxu0 %v935
  %v1068 = vpop.f32.mrb[0].mxu0
  %v1069 = vadd.f32 0.0, %v1068
  %v1070 = vpop.f32.mrb[0].mxu0
  %1071 = vmatprep.mubr.f32.mxu0 0.0
  %1072 = vmatmul.mubr.f32.gmra.mrb[0].mxu0 %v938
  %v1073 = vpop.f32.mrb[0].mxu0
  %v1074 = vadd.f32 0.0, %v1073
  %v1075 = vpop.f32.mrb[0].mxu0
  %1076 = vmatprep.mubr.f32.mxu0 0.0
  %1077 = vmatmul.mubr.f32.gmra.mrb[0].mxu0 %v941
  %v1078 = vpop.f32.mrb[0].mxu0
  %v1079 = vadd.f32 0.0, %v1078
  %v1080 = vpop.f32.mrb[0].mxu0
  %1081 = vmatprep.mubr.f32.mxu0 0.0
  %1082 = vmatmul.mubr.f32.gmra.mrb[0].mxu0 %v944
  %v1083 = vpop.f32.mrb[0].mxu0
  %v1084 = vadd.f32 0.0, %v1083
  %v1085 = vpop.f32.mrb[0].mxu0
  %1086 = vmatprep.mubr.f32.mxu0 0.0
  %1087 = vmatmul.mubr.f32.gmra.mrb[0].mxu0 %v947
  %v1088 = vpop.f32.mrb[0].mxu0
  %v1089 = vadd.f32 0.0, %v1088
  %v1090 = vpop.f32.mrb[0].mxu0
  %1091 = vmatprep.mubr.f32.mxu0 0.0
  %1092 = vmatmul.mubr.f32.gmra.mrb[0].mxu0 %v950
  %v1093 = vpop.f32.mrb[0].mxu0
  %v1094 = vadd.f32 0.0, %v1093
  %v1095 = vpop.f32.mrb[0].mxu0
  %1096 = vdwg.mxu0
  %v1097 = vsel %vm257, %v1019, 0.0
  %v1098 = vsel %vm258, %v1024, 0.0
  %v1099 = vsel %vm259, %v1029, 0.0
  %v1100 = vsel %vm260, %v1034, 0.0
  %v1101 = vsel %vm261, %v1039, 0.0
  %v1102 = vsel %vm262, %v1044, 0.0
  %v1103 = vsel %vm263, %v1049, 0.0
  %v1104 = vsel %vm264, %v1054, 0.0
  %v1105 = vsel %vm265, %v1059, 0.0
  %v1106 = vsel %vm266, %v1064, 0.0
  %v1107 = vsel %vm267, %v1069, 0.0
  %v1108 = vsel %vm268, %v1074, 0.0
  %v1109 = vsel %vm269, %v1079, 0.0
  %v1110 = vsel %vm270, %v1084, 0.0
  %v1111 = vsel %vm271, %v1089, 0.0
  %v1112 = vsel %vm272, %v1094, 0.0
  %v1113 = vadd.f32 %v1097, %v1099
  %v1114 = vadd.f32 %v1098, %v1100
  %v1115 = vadd.f32 %v1113, %v1101
  %v1116 = vadd.f32 %v1114, %v1102
  %v1117 = vadd.f32 %v1115, %v1103
  %v1118 = vadd.f32 %v1116, %v1104
  %v1119 = vadd.f32 %v1117, %v1105
  %v1120 = vadd.f32 %v1118, %v1106
  %v1121 = vadd.f32 %v1119, %v1107
  %v1122 = vadd.f32 %v1120, %v1108
  %v1123 = vadd.f32 %v1121, %v1109
  %v1124 = vadd.f32 %v1122, %v1110
  %v1125 = vadd.f32 %v1123, %v1111
  %v1126 = vadd.f32 %v1124, %v1112
  %v1127 = vsel %vm85, %v896, -inf
  %1128 = vmax.xlane.f32.xlu0 %v1127
  %v1129 = vpop.xlane.xlu0 %1128
  %v1130 = vsel %vm85, %v897, -inf
  %1131 = vmax.xlane.f32.xlu0 %v1130
  %v1132 = vpop.xlane.xlu0 %1131
  %v1133 = vsub.f32 %v896, %v1129
  %v1134 = vsub.f32 %v897, %v1132
  %v1135 = vmul.f32 %v1133, 1.442695
  %v1136 = vpow.pop %v1135
  %v1137 = vmul.f32 %v1134, 1.442695
  %v1138 = vpow.pop %v1137
  %v1139 = vsel %vm85, %v1136, 0.0
  %1140 = vadd.xlane.f32.xlu0 %v1139
  %v1141 = vpop.xlane.xlu0 %1140
  %v1142 = vsel %vm85, %v1138, 0.0
  %1143 = vadd.xlane.f32.xlu0 %v1142
  %v1144 = vpop.xlane.xlu0 %1143
  %v1145 = vrcp.pop %v1141
  %v1146 = vrcp.pop %v1144
  %v1147 = vmul.f32 %v1136, %v1145
  %v1148 = vmul.f32 %v1138, %v1146
  %v1149 = vmul.f32 %v1147, %v896
  %v1150 = vmul.f32 %v1148, %v897
  %v1151 = vsel %vm85, %v1149, 0.0
  %1152 = vadd.xlane.f32.xlu0 %v1151
  %v1153 = vpop.xlane.xlu0 %1152
  %v1154 = vsel %vm85, %v1150, 0.0
  %1155 = vadd.xlane.f32.xlu0 %v1154
  %v1156 = vpop.xlane.xlu0 %1155
  %v1157 = vlaneseq
  %v1158 = vshrl.u32 %v1157, 7
  %v1159 = vsub.s32 0, %v1158
  %v1160 = vrot.slane %v18, %v1159
  %v1161 = vmul.f32 %v1153, %v1160
  %v1162 = vmul.f32 %v1156, %v1160
  %v1163 = vlaneseq
  %v1164 = vshrl.u32 %v1163, 7
  %v1165 = vsub.s32 0, %v1164
  %v1166 = vrot.slane %v19, %v1165
  %v1167 = vadd.f32 %v1161, %v1166
  %v1168 = vadd.f32 %v1162, %v1166
  %v1169 = vadd.f32 %v1125, %v1167
  %v1170 = vadd.f32 %v1126, %v1168
  %v1171 = vlaneseq
  %v1172 = vshrl.u32 %v1171, 7
  %v1173 = vsub.s32 0, %v1172
  %v1174 = vrot.slane %v17, %v1173
  %1179 = vrot.lane.b32.xlu0 %v11, 32
  %v1180 = vpop.permute.xlu0 %1179
  %1181 = vrot.lane.b32.xlu0 %v12, 32
  %v1182 = vpop.permute.xlu0 %1181
  %1183 = vrot.lane.b32.xlu0 %v13, 32
  %v1184 = vpop.permute.xlu0 %1183
  %1185 = vrot.lane.b32.xlu0 %v14, 32
  %v1186 = vpop.permute.xlu0 %1185
  %v1192 = vsel %vm92, %v1169, 0
  %v1195 = vsel %vm92, %v1170, 0
  %1197 = vmatprep.subr.mxu0 0.0
  %1198 = vmatpush1.msra.mxu0 %v1180
  %1199 = vmatprep.subr.mxu0 0.0
  %1200 = vmatpush1.msra.mxu0 %v1182
  %1201 = vmatprep.subr.mxu0 0.0
  %1202 = vmatpush1.msra.mxu0 %v1184
  %1203 = vmatprep.subr.mxu0 0.0
  %1204 = vmatpush1.msra.mxu0 %v1186
  %1205 = vmatprep.subr.mxu0 0.0
  %1206 = vmatpush1.msra.mxu0 0.0
  %1207 = vmatprep.subr.mxu0 0.0
  %1208 = vmatpush1.msra.mxu0 0.0
  %1209 = vmatprep.subr.mxu0 0.0
  %1210 = vmatpush1.msra.mxu0 0.0
  %1211 = vmatprep.subr.mxu0 0.0
  %1212 = vmatpush1.msra.mxu0 0.0
  %1213 = vmatprep.subr.mxu0 0.0
  %1214 = vmatpush1.msra.mxu0 0.0
  %1215 = vmatprep.subr.mxu0 0.0
  %1216 = vmatpush1.msra.mxu0 0.0
  %1217 = vmatprep.subr.mxu0 0.0
  %1218 = vmatpush1.msra.mxu0 0.0
  %1219 = vmatprep.subr.mxu0 0.0
  %1220 = vmatpush1.msra.mxu0 0.0
  %1221 = vmatprep.subr.mxu0 0.0
  %1222 = vmatpush1.msra.mxu0 0.0
  %1223 = vmatprep.subr.mxu0 0.0
  %1224 = vmatpush1.msra.mxu0 0.0
  %1225 = vmatprep.subr.mxu0 0.0
  %1226 = vmatpush1.msra.mxu0 0.0
  %1227 = vmatprep.subr.mxu0 0.0
  %1228 = vmatpush1.msra.mxu0 0.0
  %1229 = vmatprep.subr.mxu0 0.0
  %1230 = vmatpush1.msra.mxu0 0.0
  %1231 = vmatprep.subr.mxu0 0.0
  %1232 = vmatpush1.msra.mxu0 0.0
  %1233 = vmatprep.subr.mxu0 0.0
  %1234 = vmatpush1.msra.mxu0 0.0
  %1235 = vmatprep.subr.mxu0 0.0
  %1236 = vmatpush1.msra.mxu0 0.0
  %1237 = vmatprep.subr.mxu0 0.0
  %1238 = vmatpush1.msra.mxu0 0.0
  %1239 = vmatprep.subr.mxu0 0.0
  %1240 = vmatpush1.msra.mxu0 0.0
  %1241 = vmatprep.subr.mxu0 0.0
  %1242 = vmatpush1.msra.mxu0 0.0
  %1243 = vmatprep.subr.mxu0 0.0
  %1244 = vmatpush1.msra.mxu0 0.0
  %1245 = vmatprep.subr.mxu0 0.0
  %1246 = vmatpush1.msra.mxu0 0.0
  %1247 = vmatprep.subr.mxu0 0.0
  %1248 = vmatpush1.msra.mxu0 0.0
  %1249 = vmatprep.subr.mxu0 0.0
  %1250 = vmatpush1.msra.mxu0 0.0
  %1251 = vmatprep.subr.mxu0 0.0
  %1252 = vmatpush1.msra.mxu0 0.0
  %1253 = vmatprep.subr.mxu0 0.0
  %1254 = vmatpush1.msra.mxu0 0.0
  %1255 = vmatprep.subr.mxu0 0.0
  %1256 = vmatpush1.msra.mxu0 0.0
  %1257 = vmatprep.subr.mxu0 0.0
  %1258 = vmatpush1.msra.mxu0 0.0
  %1259 = vmatprep.subr.mxu0 0.0
  %1260 = vmatpush1.msra.mxu0 0.0
  %1261 = vmatprep.mubr.f32.mxu0 0.0
  %1262 = vmatmul.mubr.f32.gmra.mrb[0].mxu0 %v1192
  %v1263 = vpop.f32.mrb[0].mxu0
  %v1264 = vadd.f32 %v1174, %v1263
  %v1265 = vpop.f32.mrb[0].mxu0
  %1266 = vmatprep.mubr.f32.mxu0 0.0
  %1267 = vmatmul.mubr.f32.gmra.mrb[0].mxu0 %v1195
  %v1268 = vpop.f32.mrb[0].mxu0
  %v1269 = vadd.f32 %v1174, %v1268
  %v1270 = vpop.f32.mrb[0].mxu0
  %1271 = vdwg.mxu0
  %1272 = vst.msk [vmem:[%s2] sm:$0xff] %vm92, %v1264
  %1273 = vst.msk [vmem:[%s2 + $0x8] sm:$0xff] %vm92, %v1269
  %1274 = vst.msk [vmem:[%s2 + $0x10] sm:$0xff] %vm85, %v896
  %1275 = vst.msk [vmem:[%s2 + $0x18] sm:$0xff] %vm85, %v897
  %vm1276 = vcmask 261248
  %1277 = vst.msk [vmem:[%s2 + $0x10] sm:$0xff] %vm1276, 0.0
  %1278 = vst.msk [vmem:[%s2 + $0x18] sm:$0xff] %vm1276, 0.0
  %s1279 = scalar_lea.vmem %s0, 40
  %v1280 = vld [vmem:[%s1279] sm:$0xff]
  %v1281 = vld [vmem:[%s1279 + $0x8] sm:$0xff]
  %v1282 = vld [vmem:[%s1279 + $0x10] sm:$0xff]
  %v1283 = vld [vmem:[%s1279 + $0x18] sm:$0xff]
  %v1284 = vld [vmem:[%s1279 + $0x20] sm:$0xff]
  %v1285 = vsel %vm81, %v1282, 0.0
  %v1286 = vsel %vm82, %v1283, 0.0
  %v1287 = vsel %vm85, %v1285, 0.0
  %1288 = vadd.xlane.f32.xlu0 %v1287
  %v1289 = vpop.xlane.xlu0 %1288
  %v1290 = vsel %vm85, %v1286, 0.0
  %1291 = vadd.xlane.f32.xlu0 %v1290
  %v1292 = vpop.xlane.xlu0 %1291
  %v1293 = vsel %vm92, %v1284, 0.0
  %v1294 = vrot.slane %v1293, 4
  %v1295 = vadd.f32 %v1293, %v1294
  %v1296 = vrot.slane %v1295, 2
  %v1297 = vadd.f32 %v1295, %v1296
  %v1298 = vrot.slane %v1297, 1
  %v1299 = vadd.f32 %v1297, %v1298
  %v1300 = vmul.f32 %v1289, %v1280
  %v1301 = vmul.f32 %v1292, %v1281
  %v1302 = vmul.f32 %v1300, %v1299
  %v1303 = vmul.f32 %v1301, %v1299
  %v1304 = vadd.f32 %v1302, %v1280
  %v1305 = vadd.f32 %v1303, %v1281
  %v1306 = vsel %vm92, %v1304, 0.0
  %1307 = vadd.xlane.f32.xlu0 %v1306
  %v1308 = vpop.xlane.xlu0 %1307
  %v1309 = vsel %vm92, %v1305, 0.0
  %1310 = vadd.xlane.f32.xlu0 %v1309
  %v1311 = vpop.xlane.xlu0 %1310
  %v1312 = vmul.f32 %v1308, %v112
  %v1313 = vmul.f32 %v1311, %v112
  %v1314 = vsub.f32 %v1304, %v1312
  %v1315 = vsub.f32 %v1305, %v1313
  %v1316 = vmul.f32 %v1314, %v1314
  %v1317 = vmul.f32 %v1315, %v1315
  %v1318 = vsel %vm92, %v1316, 0.0
  %1319 = vadd.xlane.f32.xlu0 %v1318
  %v1320 = vpop.xlane.xlu0 %1319
  %v1321 = vsel %vm92, %v1317, 0.0
  %1322 = vadd.xlane.f32.xlu0 %v1321
  %v1323 = vpop.xlane.xlu0 %1322
  %v1324 = vmul.f32 %v1320, %v112
  %v1325 = vmul.f32 %v1323, %v112
  %v1326 = vadd.f32 %v1324, 1e-05
  %v1327 = vadd.f32 %v1325, 1e-05
  %v1328 = vrsqrt.pop %v1326
  %v1329 = vrsqrt.pop %v1327
  %v1330 = vmul.f32 %v1314, %v1328
  %v1331 = vmul.f32 %v1315, %v1329
  %v1332 = vmul.f32 %v1330, %v136
  %v1333 = vmul.f32 %v1331, %v136
  %v1334 = vadd.f32 %v1332, %v142
  %v1335 = vadd.f32 %v1333, %v142
  %v1337 = vsel %vm92, %v1334, 0
  %v1340 = vsel %vm92, %v1335, 0
  %1342 = vmatprep.subr.mxu0 0.0
  %1343 = vmatpush1.msra.mxu0 %v11
  %1344 = vmatprep.subr.mxu0 0.0
  %1345 = vmatpush1.msra.mxu0 %v12
  %1346 = vmatprep.subr.mxu0 0.0
  %1347 = vmatpush1.msra.mxu0 %v13
  %1348 = vmatprep.subr.mxu0 0.0
  %1349 = vmatpush1.msra.mxu0 %v14
  %1350 = vmatprep.subr.mxu0 0.0
  %1351 = vmatpush1.msra.mxu0 0.0
  %1352 = vmatprep.subr.mxu0 0.0
  %1353 = vmatpush1.msra.mxu0 0.0
  %1354 = vmatprep.subr.mxu0 0.0
  %1355 = vmatpush1.msra.mxu0 0.0
  %1356 = vmatprep.subr.mxu0 0.0
  %1357 = vmatpush1.msra.mxu0 0.0
  %1358 = vmatprep.subr.mxu0 0.0
  %1359 = vmatpush1.msra.mxu0 0.0
  %1360 = vmatprep.subr.mxu0 0.0
  %1361 = vmatpush1.msra.mxu0 0.0
  %1362 = vmatprep.subr.mxu0 0.0
  %1363 = vmatpush1.msra.mxu0 0.0
  %1364 = vmatprep.subr.mxu0 0.0
  %1365 = vmatpush1.msra.mxu0 0.0
  %1366 = vmatprep.subr.mxu0 0.0
  %1367 = vmatpush1.msra.mxu0 0.0
  %1368 = vmatprep.subr.mxu0 0.0
  %1369 = vmatpush1.msra.mxu0 0.0
  %1370 = vmatprep.subr.mxu0 0.0
  %1371 = vmatpush1.msra.mxu0 0.0
  %1372 = vmatprep.subr.mxu0 0.0
  %1373 = vmatpush1.msra.mxu0 0.0
  %1374 = vmatprep.subr.mxu0 0.0
  %1375 = vmatpush1.msra.mxu0 0.0
  %1376 = vmatprep.subr.mxu0 0.0
  %1377 = vmatpush1.msra.mxu0 0.0
  %1378 = vmatprep.subr.mxu0 0.0
  %1379 = vmatpush1.msra.mxu0 0.0
  %1380 = vmatprep.subr.mxu0 0.0
  %1381 = vmatpush1.msra.mxu0 0.0
  %1382 = vmatprep.subr.mxu0 0.0
  %1383 = vmatpush1.msra.mxu0 0.0
  %1384 = vmatprep.subr.mxu0 0.0
  %1385 = vmatpush1.msra.mxu0 0.0
  %1386 = vmatprep.subr.mxu0 0.0
  %1387 = vmatpush1.msra.mxu0 0.0
  %1388 = vmatprep.subr.mxu0 0.0
  %1389 = vmatpush1.msra.mxu0 0.0
  %1390 = vmatprep.subr.mxu0 0.0
  %1391 = vmatpush1.msra.mxu0 0.0
  %1392 = vmatprep.subr.mxu0 0.0
  %1393 = vmatpush1.msra.mxu0 0.0
  %1394 = vmatprep.subr.mxu0 0.0
  %1395 = vmatpush1.msra.mxu0 0.0
  %1396 = vmatprep.subr.mxu0 0.0
  %1397 = vmatpush1.msra.mxu0 0.0
  %1398 = vmatprep.subr.mxu0 0.0
  %1399 = vmatpush1.msra.mxu0 0.0
  %1400 = vmatprep.subr.mxu0 0.0
  %1401 = vmatpush1.msra.mxu0 0.0
  %1402 = vmatprep.subr.mxu0 0.0
  %1403 = vmatpush1.msra.mxu0 0.0
  %1404 = vmatprep.subr.mxu0 0.0
  %1405 = vmatpush1.msra.mxu0 0.0
  %1406 = vmatprep.mubr.f32.mxu0 0.0
  %1407 = vmatmul.mubr.f32.gmra.mrb[0].mxu0 %v1337
  %v1408 = vpop.f32.mrb[0].mxu0
  %v1409 = vadd.f32 0.0, %v1408
  %v1410 = vpop.f32.mrb[0].mxu0
  %1411 = vmatprep.mubr.f32.mxu0 0.0
  %1412 = vmatmul.mubr.f32.gmra.mrb[0].mxu0 %v1340
  %v1413 = vpop.f32.mrb[0].mxu0
  %v1414 = vadd.f32 0.0, %v1413
  %v1415 = vpop.f32.mrb[0].mxu0
  %1416 = vdwg.mxu0
  %v1417 = vsel %vm257, %v1409, 0.0
  %v1418 = vsel %vm258, %v1414, 0.0
  %v1419 = vsel %vm259, %v1409, 0.0
  %v1420 = vsel %vm260, %v1414, 0.0
  %v1421 = vsel %vm261, %v1409, 0.0
  %v1422 = vsel %vm262, %v1414, 0.0
  %v1423 = vsel %vm263, %v1409, 0.0
  %v1424 = vsel %vm264, %v1414, 0.0
  %v1425 = vsel %vm265, %v1409, 0.0
  %v1426 = vsel %vm266, %v1414, 0.0
  %v1427 = vsel %vm267, %v1409, 0.0
  %v1428 = vsel %vm268, %v1414, 0.0
  %v1429 = vsel %vm269, %v1409, 0.0
  %v1430 = vsel %vm270, %v1414, 0.0
  %v1431 = vsel %vm271, %v1409, 0.0
  %v1432 = vsel %vm272, %v1414, 0.0
  %1435 = vrot.lane.b32.xlu0 %v1409, 96
  %v1436 = vpop.permute.xlu0 %1435
  %1437 = vrot.lane.b32.xlu0 %v1414, 96
  %v1438 = vpop.permute.xlu0 %1437
  %v1440 = vsel %vm92, %v1417, 0
  %v1443 = vsel %vm92, %v1418, 0
  %v1446 = vsel %vm92, %v1419, 0
  %v1449 = vsel %vm92, %v1420, 0
  %v1452 = vsel %vm92, %v1421, 0
  %v1455 = vsel %vm92, %v1422, 0
  %v1458 = vsel %vm92, %v1423, 0
  %v1461 = vsel %vm92, %v1424, 0
  %v1464 = vsel %vm92, %v1425, 0
  %v1467 = vsel %vm92, %v1426, 0
  %v1470 = vsel %vm92, %v1427, 0
  %v1473 = vsel %vm92, %v1428, 0
  %v1476 = vsel %vm92, %v1429, 0
  %v1479 = vsel %vm92, %v1430, 0
  %v1482 = vsel %vm92, %v1431, 0
  %v1485 = vsel %vm92, %v1432, 0
  %v1487 = vsel %vm92, %v1436, 0
  %v1489 = vsel %vm92, %v1438, 0
  %1491 = vmatprep.subr.mxu0 0.0
  %1492 = vmatpush1.xpose.msra.mxu0 %v1487
  %1493 = vmatprep.subr.mxu0 0.0
  %1494 = vmatpush1.xpose.msra.mxu0 %v1489
  %1495 = vmatprep.subr.mxu0 0.0
  %1496 = vmatpush1.xpose.msra.mxu0 0.0
  %1497 = vmatprep.subr.mxu0 0.0
  %1498 = vmatpush1.xpose.msra.mxu0 0.0
  %1499 = vmatprep.subr.mxu0 0.0
  %1500 = vmatpush1.xpose.msra.mxu0 0.0
  %1501 = vmatprep.subr.mxu0 0.0
  %1502 = vmatpush1.xpose.msra.mxu0 0.0
  %1503 = vmatprep.subr.mxu0 0.0
  %1504 = vmatpush1.xpose.msra.mxu0 0.0
  %1505 = vmatprep.subr.mxu0 0.0
  %1506 = vmatpush1.xpose.msra.mxu0 0.0
  %1507 = vmatprep.subr.mxu0 0.0
  %1508 = vmatpush1.xpose.msra.mxu0 0.0
  %1509 = vmatprep.subr.mxu0 0.0
  %1510 = vmatpush1.xpose.msra.mxu0 0.0
  %1511 = vmatprep.subr.mxu0 0.0
  %1512 = vmatpush1.xpose.msra.mxu0 0.0
  %1513 = vmatprep.subr.mxu0 0.0
  %1514 = vmatpush1.xpose.msra.mxu0 0.0
  %1515 = vmatprep.subr.mxu0 0.0
  %1516 = vmatpush1.xpose.msra.mxu0 0.0
  %1517 = vmatprep.subr.mxu0 0.0
  %1518 = vmatpush1.xpose.msra.mxu0 0.0
  %1519 = vmatprep.subr.mxu0 0.0
  %1520 = vmatpush1.xpose.msra.mxu0 0.0
  %1521 = vmatprep.subr.mxu0 0.0
  %1522 = vmatpush1.xpose.msra.mxu0 0.0
  %1523 = vmatprep.subr.mxu0 0.0
  %1524 = vmatpush1.xpose.msra.mxu0 0.0
  %1525 = vmatprep.subr.mxu0 0.0
  %1526 = vmatpush1.xpose.msra.mxu0 0.0
  %1527 = vmatprep.subr.mxu0 0.0
  %1528 = vmatpush1.xpose.msra.mxu0 0.0
  %1529 = vmatprep.subr.mxu0 0.0
  %1530 = vmatpush1.xpose.msra.mxu0 0.0
  %1531 = vmatprep.subr.mxu0 0.0
  %1532 = vmatpush1.xpose.msra.mxu0 0.0
  %1533 = vmatprep.subr.mxu0 0.0
  %1534 = vmatpush1.xpose.msra.mxu0 0.0
  %1535 = vmatprep.subr.mxu0 0.0
  %1536 = vmatpush1.xpose.msra.mxu0 0.0
  %1537 = vmatprep.subr.mxu0 0.0
  %1538 = vmatpush1.xpose.msra.mxu0 0.0
  %1539 = vmatprep.subr.mxu0 0.0
  %1540 = vmatpush1.xpose.msra.mxu0 0.0
  %1541 = vmatprep.subr.mxu0 0.0
  %1542 = vmatpush1.xpose.msra.mxu0 0.0
  %1543 = vmatprep.subr.mxu0 0.0
  %1544 = vmatpush1.xpose.msra.mxu0 0.0
  %1545 = vmatprep.subr.mxu0 0.0
  %1546 = vmatpush1.xpose.msra.mxu0 0.0
  %1547 = vmatprep.subr.mxu0 0.0
  %1548 = vmatpush1.xpose.msra.mxu0 0.0
  %1549 = vmatprep.subr.mxu0 0.0
  %1550 = vmatpush1.xpose.msra.mxu0 0.0
  %1551 = vmatprep.subr.mxu0 0.0
  %1552 = vmatpush1.xpose.msra.mxu0 0.0
  %1553 = vmatprep.subr.mxu0 0.0
  %1554 = vmatpush1.xpose.msra.mxu0 0.0
  %1555 = vmatprep.mubr.f32.mxu0 0.0
  %1556 = vmatmul.mubr.f32.gmra.mrb[0].mxu0 %v1440
  %v1557 = vpop.f32.mrb[0].mxu0
  %v1558 = vadd.f32 0.0, %v1557
  %v1559 = vpop.f32.mrb[0].mxu0
  %1560 = vmatprep.mubr.f32.mxu0 0.0
  %1561 = vmatmul.mubr.f32.gmra.mrb[0].mxu0 %v1443
  %v1562 = vpop.f32.mrb[0].mxu0
  %v1563 = vadd.f32 0.0, %v1562
  %v1564 = vpop.f32.mrb[0].mxu0
  %1565 = vmatprep.mubr.f32.mxu0 0.0
  %1566 = vmatmul.mubr.f32.gmra.mrb[0].mxu0 %v1446
  %v1567 = vpop.f32.mrb[0].mxu0
  %v1568 = vadd.f32 0.0, %v1567
  %v1569 = vpop.f32.mrb[0].mxu0
  %1570 = vmatprep.mubr.f32.mxu0 0.0
  %1571 = vmatmul.mubr.f32.gmra.mrb[0].mxu0 %v1449
  %v1572 = vpop.f32.mrb[0].mxu0
  %v1573 = vadd.f32 0.0, %v1572
  %v1574 = vpop.f32.mrb[0].mxu0
  %1575 = vmatprep.mubr.f32.mxu0 0.0
  %1576 = vmatmul.mubr.f32.gmra.mrb[0].mxu0 %v1452
  %v1577 = vpop.f32.mrb[0].mxu0
  %v1578 = vadd.f32 0.0, %v1577
  %v1579 = vpop.f32.mrb[0].mxu0
  %1580 = vmatprep.mubr.f32.mxu0 0.0
  %1581 = vmatmul.mubr.f32.gmra.mrb[0].mxu0 %v1455
  %v1582 = vpop.f32.mrb[0].mxu0
  %v1583 = vadd.f32 0.0, %v1582
  %v1584 = vpop.f32.mrb[0].mxu0
  %1585 = vmatprep.mubr.f32.mxu0 0.0
  %1586 = vmatmul.mubr.f32.gmra.mrb[0].mxu0 %v1458
  %v1587 = vpop.f32.mrb[0].mxu0
  %v1588 = vadd.f32 0.0, %v1587
  %v1589 = vpop.f32.mrb[0].mxu0
  %1590 = vmatprep.mubr.f32.mxu0 0.0
  %1591 = vmatmul.mubr.f32.gmra.mrb[0].mxu0 %v1461
  %v1592 = vpop.f32.mrb[0].mxu0
  %v1593 = vadd.f32 0.0, %v1592
  %v1594 = vpop.f32.mrb[0].mxu0
  %1595 = vmatprep.mubr.f32.mxu0 0.0
  %1596 = vmatmul.mubr.f32.gmra.mrb[0].mxu0 %v1464
  %v1597 = vpop.f32.mrb[0].mxu0
  %v1598 = vadd.f32 0.0, %v1597
  %v1599 = vpop.f32.mrb[0].mxu0
  %1600 = vmatprep.mubr.f32.mxu0 0.0
  %1601 = vmatmul.mubr.f32.gmra.mrb[0].mxu0 %v1467
  %v1602 = vpop.f32.mrb[0].mxu0
  %v1603 = vadd.f32 0.0, %v1602
  %v1604 = vpop.f32.mrb[0].mxu0
  %1605 = vmatprep.mubr.f32.mxu0 0.0
  %1606 = vmatmul.mubr.f32.gmra.mrb[0].mxu0 %v1470
  %v1607 = vpop.f32.mrb[0].mxu0
  %v1608 = vadd.f32 0.0, %v1607
  %v1609 = vpop.f32.mrb[0].mxu0
  %1610 = vmatprep.mubr.f32.mxu0 0.0
  %1611 = vmatmul.mubr.f32.gmra.mrb[0].mxu0 %v1473
  %v1612 = vpop.f32.mrb[0].mxu0
  %v1613 = vadd.f32 0.0, %v1612
  %v1614 = vpop.f32.mrb[0].mxu0
  %1615 = vmatprep.mubr.f32.mxu0 0.0
  %1616 = vmatmul.mubr.f32.gmra.mrb[0].mxu0 %v1476
  %v1617 = vpop.f32.mrb[0].mxu0
  %v1618 = vadd.f32 0.0, %v1617
  %v1619 = vpop.f32.mrb[0].mxu0
  %1620 = vmatprep.mubr.f32.mxu0 0.0
  %1621 = vmatmul.mubr.f32.gmra.mrb[0].mxu0 %v1479
  %v1622 = vpop.f32.mrb[0].mxu0
  %v1623 = vadd.f32 0.0, %v1622
  %v1624 = vpop.f32.mrb[0].mxu0
  %1625 = vmatprep.mubr.f32.mxu0 0.0
  %1626 = vmatmul.mubr.f32.gmra.mrb[0].mxu0 %v1482
  %v1627 = vpop.f32.mrb[0].mxu0
  %v1628 = vadd.f32 0.0, %v1627
  %v1629 = vpop.f32.mrb[0].mxu0
  %1630 = vmatprep.mubr.f32.mxu0 0.0
  %1631 = vmatmul.mubr.f32.gmra.mrb[0].mxu0 %v1485
  %v1632 = vpop.f32.mrb[0].mxu0
  %v1633 = vadd.f32 0.0, %v1632
  %v1634 = vpop.f32.mrb[0].mxu0
  %1635 = vdwg.mxu0
  %v1636 = vmul.f32 %v526, %v1282
  %v1637 = vmul.f32 %v526, %v1283
  %v1638 = vmul.f32 %v530, %v1282
  %v1639 = vmul.f32 %v530, %v1283
  %v1640 = vmul.f32 %v534, %v1282
  %v1641 = vmul.f32 %v534, %v1283
  %v1642 = vmul.f32 %v538, %v1282
  %v1643 = vmul.f32 %v538, %v1283
  %v1644 = vmul.f32 %v542, %v1282
  %v1645 = vmul.f32 %v542, %v1283
  %v1646 = vmul.f32 %v546, %v1282
  %v1647 = vmul.f32 %v546, %v1283
  %v1648 = vmul.f32 %v550, %v1282
  %v1649 = vmul.f32 %v550, %v1283
  %v1650 = vmul.f32 %v554, %v1282
  %v1651 = vmul.f32 %v554, %v1283
  %v1652 = vadd.f32 %v1558, %v1636
  %v1653 = vadd.f32 %v1563, %v1637
  %v1654 = vadd.f32 %v1568, %v1638
  %v1655 = vadd.f32 %v1573, %v1639
  %v1656 = vadd.f32 %v1578, %v1640
  %v1657 = vadd.f32 %v1583, %v1641
  %v1658 = vadd.f32 %v1588, %v1642
  %v1659 = vadd.f32 %v1593, %v1643
  %v1660 = vadd.f32 %v1598, %v1644
  %v1661 = vadd.f32 %v1603, %v1645
  %v1662 = vadd.f32 %v1608, %v1646
  %v1663 = vadd.f32 %v1613, %v1647
  %v1664 = vadd.f32 %v1618, %v1648
  %v1665 = vadd.f32 %v1623, %v1649
  %v1666 = vadd.f32 %v1628, %v1650
  %v1667 = vadd.f32 %v1633, %v1651
  %v1668 = vadd.f32 %v1652, %v590
  %v1669 = vadd.f32 %v1653, %v590
  %v1670 = vadd.f32 %v1654, %v594
  %v1671 = vadd.f32 %v1655, %v594
  %v1672 = vadd.f32 %v1656, %v598
  %v1673 = vadd.f32 %v1657, %v598
  %v1674 = vadd.f32 %v1658, %v602
  %v1675 = vadd.f32 %v1659, %v602
  %v1676 = vadd.f32 %v1660, %v606
  %v1677 = vadd.f32 %v1661, %v606
  %v1678 = vadd.f32 %v1662, %v610
  %v1679 = vadd.f32 %v1663, %v610
  %v1680 = vadd.f32 %v1664, %v614
  %v1681 = vadd.f32 %v1665, %v614
  %v1682 = vadd.f32 %v1666, %v618
  %v1683 = vadd.f32 %v1667, %v618
  %v1684 = vsel %vm85, %v1668, -inf
  %1685 = vmax.xlane.f32.xlu0 %v1684
  %v1686 = vpop.xlane.xlu0 %1685
  %v1687 = vsel %vm85, %v1669, -inf
  %1688 = vmax.xlane.f32.xlu0 %v1687
  %v1689 = vpop.xlane.xlu0 %1688
  %v1690 = vsel %vm85, %v1670, -inf
  %1691 = vmax.xlane.f32.xlu0 %v1690
  %v1692 = vpop.xlane.xlu0 %1691
  %v1693 = vsel %vm85, %v1671, -inf
  %1694 = vmax.xlane.f32.xlu0 %v1693
  %v1695 = vpop.xlane.xlu0 %1694
  %v1696 = vsel %vm85, %v1672, -inf
  %1697 = vmax.xlane.f32.xlu0 %v1696
  %v1698 = vpop.xlane.xlu0 %1697
  %v1699 = vsel %vm85, %v1673, -inf
  %1700 = vmax.xlane.f32.xlu0 %v1699
  %v1701 = vpop.xlane.xlu0 %1700
  %v1702 = vsel %vm85, %v1674, -inf
  %1703 = vmax.xlane.f32.xlu0 %v1702
  %v1704 = vpop.xlane.xlu0 %1703
  %v1705 = vsel %vm85, %v1675, -inf
  %1706 = vmax.xlane.f32.xlu0 %v1705
  %v1707 = vpop.xlane.xlu0 %1706
  %v1708 = vsel %vm85, %v1676, -inf
  %1709 = vmax.xlane.f32.xlu0 %v1708
  %v1710 = vpop.xlane.xlu0 %1709
  %v1711 = vsel %vm85, %v1677, -inf
  %1712 = vmax.xlane.f32.xlu0 %v1711
  %v1713 = vpop.xlane.xlu0 %1712
  %v1714 = vsel %vm85, %v1678, -inf
  %1715 = vmax.xlane.f32.xlu0 %v1714
  %v1716 = vpop.xlane.xlu0 %1715
  %v1717 = vsel %vm85, %v1679, -inf
  %1718 = vmax.xlane.f32.xlu0 %v1717
  %v1719 = vpop.xlane.xlu0 %1718
  %v1720 = vsel %vm85, %v1680, -inf
  %1721 = vmax.xlane.f32.xlu0 %v1720
  %v1722 = vpop.xlane.xlu0 %1721
  %v1723 = vsel %vm85, %v1681, -inf
  %1724 = vmax.xlane.f32.xlu0 %v1723
  %v1725 = vpop.xlane.xlu0 %1724
  %v1726 = vsel %vm85, %v1682, -inf
  %1727 = vmax.xlane.f32.xlu0 %v1726
  %v1728 = vpop.xlane.xlu0 %1727
  %v1729 = vsel %vm85, %v1683, -inf
  %1730 = vmax.xlane.f32.xlu0 %v1729
  %v1731 = vpop.xlane.xlu0 %1730
  %v1732 = vsub.f32 %v1668, %v1686
  %v1733 = vsub.f32 %v1669, %v1689
  %v1734 = vsub.f32 %v1670, %v1692
  %v1735 = vsub.f32 %v1671, %v1695
  %v1736 = vsub.f32 %v1672, %v1698
  %v1737 = vsub.f32 %v1673, %v1701
  %v1738 = vsub.f32 %v1674, %v1704
  %v1739 = vsub.f32 %v1675, %v1707
  %v1740 = vsub.f32 %v1676, %v1710
  %v1741 = vsub.f32 %v1677, %v1713
  %v1742 = vsub.f32 %v1678, %v1716
  %v1743 = vsub.f32 %v1679, %v1719
  %v1744 = vsub.f32 %v1680, %v1722
  %v1745 = vsub.f32 %v1681, %v1725
  %v1746 = vsub.f32 %v1682, %v1728
  %v1747 = vsub.f32 %v1683, %v1731
  %v1748 = vmul.f32 %v1732, 1.442695
  %v1749 = vpow.pop %v1748
  %v1750 = vmul.f32 %v1733, 1.442695
  %v1751 = vpow.pop %v1750
  %v1752 = vmul.f32 %v1734, 1.442695
  %v1753 = vpow.pop %v1752
  %v1754 = vmul.f32 %v1735, 1.442695
  %v1755 = vpow.pop %v1754
  %v1756 = vmul.f32 %v1736, 1.442695
  %v1757 = vpow.pop %v1756
  %v1758 = vmul.f32 %v1737, 1.442695
  %v1759 = vpow.pop %v1758
  %v1760 = vmul.f32 %v1738, 1.442695
  %v1761 = vpow.pop %v1760
  %v1762 = vmul.f32 %v1739, 1.442695
  %v1763 = vpow.pop %v1762
  %v1764 = vmul.f32 %v1740, 1.442695
  %v1765 = vpow.pop %v1764
  %v1766 = vmul.f32 %v1741, 1.442695
  %v1767 = vpow.pop %v1766
  %v1768 = vmul.f32 %v1742, 1.442695
  %v1769 = vpow.pop %v1768
  %v1770 = vmul.f32 %v1743, 1.442695
  %v1771 = vpow.pop %v1770
  %v1772 = vmul.f32 %v1744, 1.442695
  %v1773 = vpow.pop %v1772
  %v1774 = vmul.f32 %v1745, 1.442695
  %v1775 = vpow.pop %v1774
  %v1776 = vmul.f32 %v1746, 1.442695
  %v1777 = vpow.pop %v1776
  %v1778 = vmul.f32 %v1747, 1.442695
  %v1779 = vpow.pop %v1778
  %v1780 = vsel %vm85, %v1749, 0.0
  %1781 = vadd.xlane.f32.xlu0 %v1780
  %v1782 = vpop.xlane.xlu0 %1781
  %v1783 = vsel %vm85, %v1751, 0.0
  %1784 = vadd.xlane.f32.xlu0 %v1783
  %v1785 = vpop.xlane.xlu0 %1784
  %v1786 = vsel %vm85, %v1753, 0.0
  %1787 = vadd.xlane.f32.xlu0 %v1786
  %v1788 = vpop.xlane.xlu0 %1787
  %v1789 = vsel %vm85, %v1755, 0.0
  %1790 = vadd.xlane.f32.xlu0 %v1789
  %v1791 = vpop.xlane.xlu0 %1790
  %v1792 = vsel %vm85, %v1757, 0.0
  %1793 = vadd.xlane.f32.xlu0 %v1792
  %v1794 = vpop.xlane.xlu0 %1793
  %v1795 = vsel %vm85, %v1759, 0.0
  %1796 = vadd.xlane.f32.xlu0 %v1795
  %v1797 = vpop.xlane.xlu0 %1796
  %v1798 = vsel %vm85, %v1761, 0.0
  %1799 = vadd.xlane.f32.xlu0 %v1798
  %v1800 = vpop.xlane.xlu0 %1799
  %v1801 = vsel %vm85, %v1763, 0.0
  %1802 = vadd.xlane.f32.xlu0 %v1801
  %v1803 = vpop.xlane.xlu0 %1802
  %v1804 = vsel %vm85, %v1765, 0.0
  %1805 = vadd.xlane.f32.xlu0 %v1804
  %v1806 = vpop.xlane.xlu0 %1805
  %v1807 = vsel %vm85, %v1767, 0.0
  %1808 = vadd.xlane.f32.xlu0 %v1807
  %v1809 = vpop.xlane.xlu0 %1808
  %v1810 = vsel %vm85, %v1769, 0.0
  %1811 = vadd.xlane.f32.xlu0 %v1810
  %v1812 = vpop.xlane.xlu0 %1811
  %v1813 = vsel %vm85, %v1771, 0.0
  %1814 = vadd.xlane.f32.xlu0 %v1813
  %v1815 = vpop.xlane.xlu0 %1814
  %v1816 = vsel %vm85, %v1773, 0.0
  %1817 = vadd.xlane.f32.xlu0 %v1816
  %v1818 = vpop.xlane.xlu0 %1817
  %v1819 = vsel %vm85, %v1775, 0.0
  %1820 = vadd.xlane.f32.xlu0 %v1819
  %v1821 = vpop.xlane.xlu0 %1820
  %v1822 = vsel %vm85, %v1777, 0.0
  %1823 = vadd.xlane.f32.xlu0 %v1822
  %v1824 = vpop.xlane.xlu0 %1823
  %v1825 = vsel %vm85, %v1779, 0.0
  %1826 = vadd.xlane.f32.xlu0 %v1825
  %v1827 = vpop.xlane.xlu0 %1826
  %v1828 = vrcp.pop %v1782
  %v1829 = vrcp.pop %v1785
  %v1830 = vrcp.pop %v1788
  %v1831 = vrcp.pop %v1791
  %v1832 = vrcp.pop %v1794
  %v1833 = vrcp.pop %v1797
  %v1834 = vrcp.pop %v1800
  %v1835 = vrcp.pop %v1803
  %v1836 = vrcp.pop %v1806
  %v1837 = vrcp.pop %v1809
  %v1838 = vrcp.pop %v1812
  %v1839 = vrcp.pop %v1815
  %v1840 = vrcp.pop %v1818
  %v1841 = vrcp.pop %v1821
  %v1842 = vrcp.pop %v1824
  %v1843 = vrcp.pop %v1827
  %v1844 = vmul.f32 %v1749, %v1828
  %v1845 = vmul.f32 %v1751, %v1829
  %v1846 = vmul.f32 %v1753, %v1830
  %v1847 = vmul.f32 %v1755, %v1831
  %v1848 = vmul.f32 %v1757, %v1832
  %v1849 = vmul.f32 %v1759, %v1833
  %v1850 = vmul.f32 %v1761, %v1834
  %v1851 = vmul.f32 %v1763, %v1835
  %v1852 = vmul.f32 %v1765, %v1836
  %v1853 = vmul.f32 %v1767, %v1837
  %v1854 = vmul.f32 %v1769, %v1838
  %v1855 = vmul.f32 %v1771, %v1839
  %v1856 = vmul.f32 %v1773, %v1840
  %v1857 = vmul.f32 %v1775, %v1841
  %v1858 = vmul.f32 %v1777, %v1842
  %v1859 = vmul.f32 %v1779, %v1843
  %v1860 = vadd.f32 %v1844, %v1668
  %v1861 = vadd.f32 %v1845, %v1669
  %v1862 = vadd.f32 %v1846, %v1670
  %v1863 = vadd.f32 %v1847, %v1671
  %v1864 = vadd.f32 %v1848, %v1672
  %v1865 = vadd.f32 %v1849, %v1673
  %v1866 = vadd.f32 %v1850, %v1674
  %v1867 = vadd.f32 %v1851, %v1675
  %v1868 = vadd.f32 %v1852, %v1676
  %v1869 = vadd.f32 %v1853, %v1677
  %v1870 = vadd.f32 %v1854, %v1678
  %v1871 = vadd.f32 %v1855, %v1679
  %v1872 = vadd.f32 %v1856, %v1680
  %v1873 = vadd.f32 %v1857, %v1681
  %v1874 = vadd.f32 %v1858, %v1682
  %v1875 = vadd.f32 %v1859, %v1683
  %v1876 = vmul.f32 %v830, %v1860
  %v1877 = vmul.f32 %v830, %v1861
  %v1878 = vmul.f32 %v834, %v1862
  %v1879 = vmul.f32 %v834, %v1863
  %v1880 = vmul.f32 %v838, %v1864
  %v1881 = vmul.f32 %v838, %v1865
  %v1882 = vmul.f32 %v842, %v1866
  %v1883 = vmul.f32 %v842, %v1867
  %v1884 = vmul.f32 %v846, %v1868
  %v1885 = vmul.f32 %v846, %v1869
  %v1886 = vmul.f32 %v850, %v1870
  %v1887 = vmul.f32 %v850, %v1871
  %v1888 = vmul.f32 %v854, %v1872
  %v1889 = vmul.f32 %v854, %v1873
  %v1890 = vmul.f32 %v858, %v1874
  %v1891 = vmul.f32 %v858, %v1875
  %v1892 = vadd.f32 %v1876, %v1878
  %v1893 = vadd.f32 %v1877, %v1879
  %v1894 = vadd.f32 %v1892, %v1880
  %v1895 = vadd.f32 %v1893, %v1881
  %v1896 = vadd.f32 %v1894, %v1882
  %v1897 = vadd.f32 %v1895, %v1883
  %v1898 = vadd.f32 %v1896, %v1884
  %v1899 = vadd.f32 %v1897, %v1885
  %v1900 = vadd.f32 %v1898, %v1886
  %v1901 = vadd.f32 %v1899, %v1887
  %v1902 = vadd.f32 %v1900, %v1888
  %v1903 = vadd.f32 %v1901, %v1889
  %v1904 = vadd.f32 %v1902, %v1890
  %v1905 = vadd.f32 %v1903, %v1891
  %v1906 = vadd.f32 %v1904, %v894
  %v1907 = vadd.f32 %v1905, %v894
  %1908 = vrot.lane.b32.xlu0 %v1409, 64
  %v1909 = vpop.permute.xlu0 %1908
  %1910 = vrot.lane.b32.xlu0 %v1414, 64
  %v1911 = vpop.permute.xlu0 %1910
  %v1915 = vsel %vm85, %v1844, 0
  %v1918 = vsel %vm85, %v1845, 0
  %v1921 = vsel %vm85, %v1846, 0
  %v1924 = vsel %vm85, %v1847, 0
  %v1927 = vsel %vm85, %v1848, 0
  %v1930 = vsel %vm85, %v1849, 0
  %v1933 = vsel %vm85, %v1850, 0
  %v1936 = vsel %vm85, %v1851, 0
  %v1939 = vsel %vm85, %v1852, 0
  %v1942 = vsel %vm85, %v1853, 0
  %v1945 = vsel %vm85, %v1854, 0
  %v1948 = vsel %vm85, %v1855, 0
  %v1951 = vsel %vm85, %v1856, 0
  %v1954 = vsel %vm85, %v1857, 0
  %v1957 = vsel %vm85, %v1858, 0
  %v1960 = vsel %vm85, %v1859, 0
  %1962 = vmatprep.subr.mxu0 0.0
  %1963 = vmatpush1.msra.mxu0 %v1909
  %1964 = vmatprep.subr.mxu0 0.0
  %1965 = vmatpush1.msra.mxu0 %v1911
  %1966 = vmatprep.subr.mxu0 0.0
  %1967 = vmatpush1.msra.mxu0 0.0
  %1968 = vmatprep.subr.mxu0 0.0
  %1969 = vmatpush1.msra.mxu0 0.0
  %1970 = vmatprep.subr.mxu0 0.0
  %1971 = vmatpush1.msra.mxu0 0.0
  %1972 = vmatprep.subr.mxu0 0.0
  %1973 = vmatpush1.msra.mxu0 0.0
  %1974 = vmatprep.subr.mxu0 0.0
  %1975 = vmatpush1.msra.mxu0 0.0
  %1976 = vmatprep.subr.mxu0 0.0
  %1977 = vmatpush1.msra.mxu0 0.0
  %1978 = vmatprep.subr.mxu0 0.0
  %1979 = vmatpush1.msra.mxu0 0.0
  %1980 = vmatprep.subr.mxu0 0.0
  %1981 = vmatpush1.msra.mxu0 0.0
  %1982 = vmatprep.subr.mxu0 0.0
  %1983 = vmatpush1.msra.mxu0 0.0
  %1984 = vmatprep.subr.mxu0 0.0
  %1985 = vmatpush1.msra.mxu0 0.0
  %1986 = vmatprep.subr.mxu0 0.0
  %1987 = vmatpush1.msra.mxu0 0.0
  %1988 = vmatprep.subr.mxu0 0.0
  %1989 = vmatpush1.msra.mxu0 0.0
  %1990 = vmatprep.subr.mxu0 0.0
  %1991 = vmatpush1.msra.mxu0 0.0
  %1992 = vmatprep.subr.mxu0 0.0
  %1993 = vmatpush1.msra.mxu0 0.0
  %1994 = vmatprep.subr.mxu0 0.0
  %1995 = vmatpush1.msra.mxu0 0.0
  %1996 = vmatprep.subr.mxu0 0.0
  %1997 = vmatpush1.msra.mxu0 0.0
  %1998 = vmatprep.subr.mxu0 0.0
  %1999 = vmatpush1.msra.mxu0 0.0
  %2000 = vmatprep.subr.mxu0 0.0
  %2001 = vmatpush1.msra.mxu0 0.0
  %2002 = vmatprep.subr.mxu0 0.0
  %2003 = vmatpush1.msra.mxu0 0.0
  %2004 = vmatprep.subr.mxu0 0.0
  %2005 = vmatpush1.msra.mxu0 0.0
  %2006 = vmatprep.subr.mxu0 0.0
  %2007 = vmatpush1.msra.mxu0 0.0
  %2008 = vmatprep.subr.mxu0 0.0
  %2009 = vmatpush1.msra.mxu0 0.0
  %2010 = vmatprep.subr.mxu0 0.0
  %2011 = vmatpush1.msra.mxu0 0.0
  %2012 = vmatprep.subr.mxu0 0.0
  %2013 = vmatpush1.msra.mxu0 0.0
  %2014 = vmatprep.subr.mxu0 0.0
  %2015 = vmatpush1.msra.mxu0 0.0
  %2016 = vmatprep.subr.mxu0 0.0
  %2017 = vmatpush1.msra.mxu0 0.0
  %2018 = vmatprep.subr.mxu0 0.0
  %2019 = vmatpush1.msra.mxu0 0.0
  %2020 = vmatprep.subr.mxu0 0.0
  %2021 = vmatpush1.msra.mxu0 0.0
  %2022 = vmatprep.subr.mxu0 0.0
  %2023 = vmatpush1.msra.mxu0 0.0
  %2024 = vmatprep.subr.mxu0 0.0
  %2025 = vmatpush1.msra.mxu0 0.0
  %2026 = vmatprep.mubr.f32.mxu0 0.0
  %2027 = vmatmul.mubr.f32.gmra.mrb[0].mxu0 %v1915
  %v2028 = vpop.f32.mrb[0].mxu0
  %v2029 = vadd.f32 0.0, %v2028
  %v2030 = vpop.f32.mrb[0].mxu0
  %2031 = vmatprep.mubr.f32.mxu0 0.0
  %2032 = vmatmul.mubr.f32.gmra.mrb[0].mxu0 %v1918
  %v2033 = vpop.f32.mrb[0].mxu0
  %v2034 = vadd.f32 0.0, %v2033
  %v2035 = vpop.f32.mrb[0].mxu0
  %2036 = vmatprep.mubr.f32.mxu0 0.0
  %2037 = vmatmul.mubr.f32.gmra.mrb[0].mxu0 %v1921
  %v2038 = vpop.f32.mrb[0].mxu0
  %v2039 = vadd.f32 0.0, %v2038
  %v2040 = vpop.f32.mrb[0].mxu0
  %2041 = vmatprep.mubr.f32.mxu0 0.0
  %2042 = vmatmul.mubr.f32.gmra.mrb[0].mxu0 %v1924
  %v2043 = vpop.f32.mrb[0].mxu0
  %v2044 = vadd.f32 0.0, %v2043
  %v2045 = vpop.f32.mrb[0].mxu0
  %2046 = vmatprep.mubr.f32.mxu0 0.0
  %2047 = vmatmul.mubr.f32.gmra.mrb[0].mxu0 %v1927
  %v2048 = vpop.f32.mrb[0].mxu0
  %v2049 = vadd.f32 0.0, %v2048
  %v2050 = vpop.f32.mrb[0].mxu0
  %2051 = vmatprep.mubr.f32.mxu0 0.0
  %2052 = vmatmul.mubr.f32.gmra.mrb[0].mxu0 %v1930
  %v2053 = vpop.f32.mrb[0].mxu0
  %v2054 = vadd.f32 0.0, %v2053
  %v2055 = vpop.f32.mrb[0].mxu0
  %2056 = vmatprep.mubr.f32.mxu0 0.0
  %2057 = vmatmul.mubr.f32.gmra.mrb[0].mxu0 %v1933
  %v2058 = vpop.f32.mrb[0].mxu0
  %v2059 = vadd.f32 0.0, %v2058
  %v2060 = vpop.f32.mrb[0].mxu0
  %2061 = vmatprep.mubr.f32.mxu0 0.0
  %2062 = vmatmul.mubr.f32.gmra.mrb[0].mxu0 %v1936
  %v2063 = vpop.f32.mrb[0].mxu0
  %v2064 = vadd.f32 0.0, %v2063
  %v2065 = vpop.f32.mrb[0].mxu0
  %2066 = vmatprep.mubr.f32.mxu0 0.0
  %2067 = vmatmul.mubr.f32.gmra.mrb[0].mxu0 %v1939
  %v2068 = vpop.f32.mrb[0].mxu0
  %v2069 = vadd.f32 0.0, %v2068
  %v2070 = vpop.f32.mrb[0].mxu0
  %2071 = vmatprep.mubr.f32.mxu0 0.0
  %2072 = vmatmul.mubr.f32.gmra.mrb[0].mxu0 %v1942
  %v2073 = vpop.f32.mrb[0].mxu0
  %v2074 = vadd.f32 0.0, %v2073
  %v2075 = vpop.f32.mrb[0].mxu0
  %2076 = vmatprep.mubr.f32.mxu0 0.0
  %2077 = vmatmul.mubr.f32.gmra.mrb[0].mxu0 %v1945
  %v2078 = vpop.f32.mrb[0].mxu0
  %v2079 = vadd.f32 0.0, %v2078
  %v2080 = vpop.f32.mrb[0].mxu0
  %2081 = vmatprep.mubr.f32.mxu0 0.0
  %2082 = vmatmul.mubr.f32.gmra.mrb[0].mxu0 %v1948
  %v2083 = vpop.f32.mrb[0].mxu0
  %v2084 = vadd.f32 0.0, %v2083
  %v2085 = vpop.f32.mrb[0].mxu0
  %2086 = vmatprep.mubr.f32.mxu0 0.0
  %2087 = vmatmul.mubr.f32.gmra.mrb[0].mxu0 %v1951
  %v2088 = vpop.f32.mrb[0].mxu0
  %v2089 = vadd.f32 0.0, %v2088
  %v2090 = vpop.f32.mrb[0].mxu0
  %2091 = vmatprep.mubr.f32.mxu0 0.0
  %2092 = vmatmul.mubr.f32.gmra.mrb[0].mxu0 %v1954
  %v2093 = vpop.f32.mrb[0].mxu0
  %v2094 = vadd.f32 0.0, %v2093
  %v2095 = vpop.f32.mrb[0].mxu0
  %2096 = vmatprep.mubr.f32.mxu0 0.0
  %2097 = vmatmul.mubr.f32.gmra.mrb[0].mxu0 %v1957
  %v2098 = vpop.f32.mrb[0].mxu0
  %v2099 = vadd.f32 0.0, %v2098
  %v2100 = vpop.f32.mrb[0].mxu0
  %2101 = vmatprep.mubr.f32.mxu0 0.0
  %2102 = vmatmul.mubr.f32.gmra.mrb[0].mxu0 %v1960
  %v2103 = vpop.f32.mrb[0].mxu0
  %v2104 = vadd.f32 0.0, %v2103
  %v2105 = vpop.f32.mrb[0].mxu0
  %2106 = vdwg.mxu0
  %v2107 = vsel %vm257, %v2029, 0.0
  %v2108 = vsel %vm258, %v2034, 0.0
  %v2109 = vsel %vm259, %v2039, 0.0
  %v2110 = vsel %vm260, %v2044, 0.0
  %v2111 = vsel %vm261, %v2049, 0.0
  %v2112 = vsel %vm262, %v2054, 0.0
  %v2113 = vsel %vm263, %v2059, 0.0
  %v2114 = vsel %vm264, %v2064, 0.0
  %v2115 = vsel %vm265, %v2069, 0.0
  %v2116 = vsel %vm266, %v2074, 0.0
  %v2117 = vsel %vm267, %v2079, 0.0
  %v2118 = vsel %vm268, %v2084, 0.0
  %v2119 = vsel %vm269, %v2089, 0.0
  %v2120 = vsel %vm270, %v2094, 0.0
  %v2121 = vsel %vm271, %v2099, 0.0
  %v2122 = vsel %vm272, %v2104, 0.0
  %v2123 = vadd.f32 %v2107, %v2109
  %v2124 = vadd.f32 %v2108, %v2110
  %v2125 = vadd.f32 %v2123, %v2111
  %v2126 = vadd.f32 %v2124, %v2112
  %v2127 = vadd.f32 %v2125, %v2113
  %v2128 = vadd.f32 %v2126, %v2114
  %v2129 = vadd.f32 %v2127, %v2115
  %v2130 = vadd.f32 %v2128, %v2116
  %v2131 = vadd.f32 %v2129, %v2117
  %v2132 = vadd.f32 %v2130, %v2118
  %v2133 = vadd.f32 %v2131, %v2119
  %v2134 = vadd.f32 %v2132, %v2120
  %v2135 = vadd.f32 %v2133, %v2121
  %v2136 = vadd.f32 %v2134, %v2122
  %v2137 = vsel %vm85, %v1906, -inf
  %2138 = vmax.xlane.f32.xlu0 %v2137
  %v2139 = vpop.xlane.xlu0 %2138
  %v2140 = vsel %vm85, %v1907, -inf
  %2141 = vmax.xlane.f32.xlu0 %v2140
  %v2142 = vpop.xlane.xlu0 %2141
  %v2143 = vsub.f32 %v1906, %v2139
  %v2144 = vsub.f32 %v1907, %v2142
  %v2145 = vmul.f32 %v2143, 1.442695
  %v2146 = vpow.pop %v2145
  %v2147 = vmul.f32 %v2144, 1.442695
  %v2148 = vpow.pop %v2147
  %v2149 = vsel %vm85, %v2146, 0.0
  %2150 = vadd.xlane.f32.xlu0 %v2149
  %v2151 = vpop.xlane.xlu0 %2150
  %v2152 = vsel %vm85, %v2148, 0.0
  %2153 = vadd.xlane.f32.xlu0 %v2152
  %v2154 = vpop.xlane.xlu0 %2153
  %v2155 = vrcp.pop %v2151
  %v2156 = vrcp.pop %v2154
  %v2157 = vmul.f32 %v2146, %v2155
  %v2158 = vmul.f32 %v2148, %v2156
  %v2159 = vmul.f32 %v2157, %v1906
  %v2160 = vmul.f32 %v2158, %v1907
  %v2161 = vsel %vm85, %v2159, 0.0
  %2162 = vadd.xlane.f32.xlu0 %v2161
  %v2163 = vpop.xlane.xlu0 %2162
  %v2164 = vsel %vm85, %v2160, 0.0
  %2165 = vadd.xlane.f32.xlu0 %v2164
  %v2166 = vpop.xlane.xlu0 %2165
  %v2167 = vmul.f32 %v2163, %v1160
  %v2168 = vmul.f32 %v2166, %v1160
  %v2169 = vadd.f32 %v2167, %v1166
  %v2170 = vadd.f32 %v2168, %v1166
  %v2171 = vadd.f32 %v2135, %v2169
  %v2172 = vadd.f32 %v2136, %v2170
  %v2174 = vsel %vm92, %v2171, 0
  %v2177 = vsel %vm92, %v2172, 0
  %2179 = vmatprep.subr.mxu0 0.0
  %2180 = vmatpush1.msra.mxu0 %v1180
  %2181 = vmatprep.subr.mxu0 0.0
  %2182 = vmatpush1.msra.mxu0 %v1182
  %2183 = vmatprep.subr.mxu0 0.0
  %2184 = vmatpush1.msra.mxu0 %v1184
  %2185 = vmatprep.subr.mxu0 0.0
  %2186 = vmatpush1.msra.mxu0 %v1186
  %2187 = vmatprep.subr.mxu0 0.0
  %2188 = vmatpush1.msra.mxu0 0.0
  %2189 = vmatprep.subr.mxu0 0.0
  %2190 = vmatpush1.msra.mxu0 0.0
  %2191 = vmatprep.subr.mxu0 0.0
  %2192 = vmatpush1.msra.mxu0 0.0
  %2193 = vmatprep.subr.mxu0 0.0
  %2194 = vmatpush1.msra.mxu0 0.0
  %2195 = vmatprep.subr.mxu0 0.0
  %2196 = vmatpush1.msra.mxu0 0.0
  %2197 = vmatprep.subr.mxu0 0.0
  %2198 = vmatpush1.msra.mxu0 0.0
  %2199 = vmatprep.subr.mxu0 0.0
  %2200 = vmatpush1.msra.mxu0 0.0
  %2201 = vmatprep.subr.mxu0 0.0
  %2202 = vmatpush1.msra.mxu0 0.0
  %2203 = vmatprep.subr.mxu0 0.0
  %2204 = vmatpush1.msra.mxu0 0.0
  %2205 = vmatprep.subr.mxu0 0.0
  %2206 = vmatpush1.msra.mxu0 0.0
  %2207 = vmatprep.subr.mxu0 0.0
  %2208 = vmatpush1.msra.mxu0 0.0
  %2209 = vmatprep.subr.mxu0 0.0
  %2210 = vmatpush1.msra.mxu0 0.0
  %2211 = vmatprep.subr.mxu0 0.0
  %2212 = vmatpush1.msra.mxu0 0.0
  %2213 = vmatprep.subr.mxu0 0.0
  %2214 = vmatpush1.msra.mxu0 0.0
  %2215 = vmatprep.subr.mxu0 0.0
  %2216 = vmatpush1.msra.mxu0 0.0
  %2217 = vmatprep.subr.mxu0 0.0
  %2218 = vmatpush1.msra.mxu0 0.0
  %2219 = vmatprep.subr.mxu0 0.0
  %2220 = vmatpush1.msra.mxu0 0.0
  %2221 = vmatprep.subr.mxu0 0.0
  %2222 = vmatpush1.msra.mxu0 0.0
  %2223 = vmatprep.subr.mxu0 0.0
  %2224 = vmatpush1.msra.mxu0 0.0
  %2225 = vmatprep.subr.mxu0 0.0
  %2226 = vmatpush1.msra.mxu0 0.0
  %2227 = vmatprep.subr.mxu0 0.0
  %2228 = vmatpush1.msra.mxu0 0.0
  %2229 = vmatprep.subr.mxu0 0.0
  %2230 = vmatpush1.msra.mxu0 0.0
  %2231 = vmatprep.subr.mxu0 0.0
  %2232 = vmatpush1.msra.mxu0 0.0
  %2233 = vmatprep.subr.mxu0 0.0
  %2234 = vmatpush1.msra.mxu0 0.0
  %2235 = vmatprep.subr.mxu0 0.0
  %2236 = vmatpush1.msra.mxu0 0.0
  %2237 = vmatprep.subr.mxu0 0.0
  %2238 = vmatpush1.msra.mxu0 0.0
  %2239 = vmatprep.subr.mxu0 0.0
  %2240 = vmatpush1.msra.mxu0 0.0
  %2241 = vmatprep.subr.mxu0 0.0
  %2242 = vmatpush1.msra.mxu0 0.0
  %2243 = vmatprep.mubr.f32.mxu0 0.0
  %2244 = vmatmul.mubr.f32.gmra.mrb[0].mxu0 %v2174
  %v2245 = vpop.f32.mrb[0].mxu0
  %v2246 = vadd.f32 %v1174, %v2245
  %v2247 = vpop.f32.mrb[0].mxu0
  %2248 = vmatprep.mubr.f32.mxu0 0.0
  %2249 = vmatmul.mubr.f32.gmra.mrb[0].mxu0 %v2177
  %v2250 = vpop.f32.mrb[0].mxu0
  %v2251 = vadd.f32 %v1174, %v2250
  %v2252 = vpop.f32.mrb[0].mxu0
  %2253 = vdwg.mxu0
  %s2254 = scalar_lea.vmem %s2, 32
  %2255 = vst.msk [vmem:[%s2254] sm:$0xff] %vm92, %v2246
  %2256 = vst.msk [vmem:[%s2254 + $0x8] sm:$0xff] %vm92, %v2251
  %2257 = vst.msk [vmem:[%s2254 + $0x10] sm:$0xff] %vm85, %v1906
  %2258 = vst.msk [vmem:[%s2254 + $0x18] sm:$0xff] %vm85, %v1907
  %2259 = vst.msk [vmem:[%s2254 + $0x10] sm:$0xff] %vm1276, 0.0
  %2260 = vst.msk [vmem:[%s2254 + $0x18] sm:$0xff] %vm1276, 0.0
  // Predicated region
  $region10: #{graph_propagation_attention.1} parent=0 // pred_check
    _
  $region11: #{graph_propagation_attention.1} parent=0 // pred_check_branch
    %2262 = sbr.rel (0) target = $region13
  $region12: #{graph_propagation_attention.1} parent=0 // pred_region
    _
  $region13: #{graph_propagation_attention.1} parent=0 // pred_fallthru
    _
  // Predicated region
  $region14: #{graph_propagation_attention.1} parent=0 // pred_check
    _
  $region15: #{graph_propagation_attention.1} parent=0 // pred_check_branch
    %2264 = sbr.rel (0) target = $region17
  $region16: #{graph_propagation_attention.1} parent=0 // pred_region
    _
  $region17: #{graph_propagation_attention.1} parent=0 // pred_fallthru
    _

</llo_original>
